<compile_context>
chip_gen: v7x
topology: tpu7x:2x2x1
jax: 0.10.0
libtpu: 0.0.40
codegen_flags: <defaults>
</compile_context>

<pallas_src>
import functools

import jax
import jax.numpy as jnp
from jax.experimental import pallas as pl
from jax.experimental.pallas import tpu as pltpu

LANES = 128


def _round_up(x, m):
    return (x + m - 1) // m * m


def _pick_batch_tile(n):
    # >=2 grid steps whenever possible (v7x has 2 TensorCores), tile capped at 32.
    if n <= 1:
        return 1
    return max(1, min(32, (n + 1) // 2))


# ----------------------------------------------------------------------------
# Fused forward kernel: conv0 -> relu -> conv1 -> relu -> fc0 -> relu -> fc_out
# -> sigmoid. One batch tile per grid step; four MXU matmuls total.
# ----------------------------------------------------------------------------
def _fused_forward_kernel(x_ref, t0_ref, b0_ref, t1_ref, b1_ref,
                          wfc0_ref, bfc0_ref, wout_ref, bout_ref, o_ref):
    f32, bf16 = jnp.float32, jnp.bfloat16

    x = x_ref[0]                                                     # (B, K0) bf16

    # conv0 (+bias, ReLU) as one Toeplitz matmul: (B, K0) @ (K0, F0)
    y0 = jnp.dot(x, t0_ref[...], preferred_element_type=f32) + b0_ref[...]
    y0 = jnp.maximum(y0, 0.0).astype(bf16)                           # (B, F0)

    # conv1 (+bias, ReLU): (B, F0) @ (F0, F1)
    y1 = jnp.dot(y0, t1_ref[...], preferred_element_type=f32) + b1_ref[...]
    y1 = jnp.maximum(y1, 0.0).astype(bf16)                           # (B, F1)

    # fc0 (+bias, ReLU); Flatten's NCHW order is folded into the weight layout.
    # Dropout layers of the original head are identity at inference.
    h = jnp.dot(y1, wfc0_ref[...], preferred_element_type=f32) + bfc0_ref[...]
    h = jnp.maximum(h, 0.0).astype(bf16)                             # (B, HID)

    # fc_out + exact sigmoid (f32).
    logits = jnp.dot(h, wout_ref[...], preferred_element_type=f32) + bout_ref[...]
    o_ref[0] = (1.0 / (1.0 + jnp.exp(-logits))).astype(o_ref.dtype)  # (B, OUT)


# ----------------------------------------------------------------------------
# Host-side (one-time) operand preparation
# ----------------------------------------------------------------------------
def _make_gather_taps(h, w, kh, kw, stride, pad, dtype):
    """0/1 matrices G_k (OH*OW, H*W): G_k[p_out, p_in] = 1 iff input pixel p_in
    feeds output p_out through conv tap k (zero rows where the tap hits padding)."""
    oh = (h + 2 * pad - kh) // stride + 1
    ow = (w + 2 * pad - kw) // stride + 1
    in_ids = jnp.arange(h * w)
    taps = []
    for dh in range(kh):
        for dw in range(kw):
            ih = jnp.arange(oh) * stride - pad + dh
            iw = jnp.arange(ow) * stride - pad + dw
            valid = ((ih >= 0) & (ih < h))[:, None] & ((iw >= 0) & (iw < w))[None, :]
            src = (jnp.clip(ih, 0, h - 1)[:, None] * w
                   + jnp.clip(iw, 0, w - 1)[None, :])
            src = src.reshape(-1)
            valid = valid.reshape(-1)
            g = (src[:, None] == in_ids[None, :]) & valid[:, None]
            taps.append(g.astype(dtype))
    return jnp.stack(taps, axis=0), oh, ow        # (kh*kw, OH*OW, H*W)


def init_params(key, in_channels=4, enc_channels=(8, 16), in_hw=16,
                hidden_size=(32,), output_size=1):
    """Logical (PyTorch-layout) parameters of the concrete BADetectionNet."""
    keys = jax.random.split(key, 12)
    p, ki = {}, 0
    c_prev = in_channels
    for i, c in enumerate(enc_channels):
        p[f"conv{i}_w"] = 0.1 * jax.random.normal(keys[ki], (c, c_prev, 3, 3),
                                                  jnp.float32); ki += 1
        p[f"conv{i}_b"] = 0.1 * jax.random.normal(keys[ki], (c,), jnp.float32); ki += 1
        c_prev = c
    hw = in_hw
    for _ in enc_channels:
        hw //= 2
    flat = enc_channels[-1] * hw * hw             # compute_output_size equivalent
    dims = [flat] + list(hidden_size)
    for i in range(len(dims) - 1):
        p[f"fc{i}_w"] = 0.1 * jax.random.normal(keys[ki], (dims[i], dims[i + 1]),
                                                jnp.float32); ki += 1
        p[f"fc{i}_b"] = 0.1 * jax.random.normal(keys[ki], (dims[i + 1],),
                                                jnp.float32); ki += 1
    p["fc_out_w"] = 0.1 * jax.random.normal(keys[ki], (dims[-1], output_size),
                                            jnp.float32); ki += 1
    p["fc_out_b"] = 0.1 * jax.random.normal(keys[ki], (output_size,),
                                            jnp.float32); ki += 1
    return p


def prepare_pallas_operands(params, *, in_channels, enc_channels, in_hw,
                            hidden_size, output_size):
    """Fold each conv (gather + weights) into a dense Toeplitz matrix, fold the
    NCHW Flatten into fc0's weights, pad everything to 128-lane multiples, bf16."""
    # TODO(synk): specialized to the 2-conv-stage encoder + 1-hidden-layer head
    # used here; the nn.Module accepts an arbitrary injected encoder / fc stack.
    assert len(enc_channels) == 2 and len(hidden_size) == 1
    bf16, f32 = jnp.bfloat16, jnp.float32

    g0, oh0, ow0 = _make_gather_taps(in_hw, in_hw, 3, 3, 2, 1, f32)
    g1, oh1, ow1 = _make_gather_taps(oh0, ow0, 3, 3, 2, 1, f32)
    c0, c1 = enc_channels
    p0, p1 = oh0 * ow0, oh1 * ow1
    hid = hidden_size[0]

    k0 = in_hw * in_hw * in_channels
    k0p = _round_up(k0, LANES)
    f0, f0p = p0 * c0, _round_up(p0 * c0, LANES)
    f1, f1p = p1 * c1, _round_up(p1 * c1, LANES)
    hidp = _round_up(hid, LANES)
    outp = _round_up(output_size, LANES)

    def conv_toeplitz(g, w):
        # g: (KH*KW, P, HW) 0/1 ; w: (Cout, Cin, KH, KW) (PyTorch OIHW)
        cout, cin, kh, kw = w.shape
        wk = jnp.transpose(w, (2, 3, 1, 0)).reshape(kh * kw, cin, cout)  # (9, Ci, Co)
        t = jnp.einsum("kpq,kio->qipo", g, wk)           # (HW, Cin, P, Cout)
        hw, p = g.shape[2], g.shape[1]
        return t.reshape(hw * cin, p * cout)             # row = q*Cin+ci, col = p*Cout+co

    t0 = jnp.pad(conv_toeplitz(g0, params["conv0_w"]),
                 ((0, k0p - k0), (0, f0p - f0))).astype(bf16)
    t1 = jnp.pad(conv_toeplitz(g1, params["conv1_w"]),
                 ((0, f0p - f0), (0, f1p - f1))).astype(bf16)
    b0 = jnp.pad(jnp.tile(params["conv0_b"][None, :], (p0, 1)).reshape(1, f0),
                 ((0, 0), (0, f0p - f0))).astype(f32)
    b1 = jnp.pad(jnp.tile(params["conv1_b"][None, :], (p1, 1)).reshape(1, f1),
                 ((0, 0), (0, f1p - f1))).astype(f32)

    # fc0: PyTorch Flatten index = c*P1 + p; our y1 layout index = p*C1 + c.
    wfc0 = params["fc0_w"].reshape(c1, p1, hid)
    wfc0 = jnp.transpose(wfc0, (1, 0, 2)).reshape(f1, hid)
    wfc0 = jnp.pad(wfc0, ((0, f1p - f1), (0, hidp - hid))).astype(bf16)
    bfc0 = jnp.pad(params["fc0_b"], (0, hidp - hid)).reshape(1, hidp).astype(f32)

    wout = jnp.pad(params["fc_out_w"],
                   ((0, hidp - hid), (0, outp - output_size))).astype(bf16)
    bout = jnp.pad(params["fc_out_b"],
                   (0, outp - output_size)).reshape(1, outp).astype(f32)

    return dict(t0=t0, b0=b0, t1=t1, b1=b1,
                wfc0=wfc0, bfc0=bfc0, wout=wout, bout=bout)


# ----------------------------------------------------------------------------
# Forward wrapper: single fused pallas_call, grid over batch tiles ("parallel")
# ----------------------------------------------------------------------------
@functools.partial(jax.jit, static_argnames=("output_size", "batch_tile"))
def ba_detection_net_forward(ops, x_nchw, *, output_size=1, batch_tile=None):
    n, cin, h, w = x_nchw.shape
    k0 = h * w * cin
    k0p = ops["t0"].shape[0]
    outp = ops["wout"].shape[1]

    if batch_tile is None:
        batch_tile = _pick_batch_tile(n)
    n_pad = _round_up(n, batch_tile)
    num_tiles = n_pad // batch_tile

    # NHWC flatten with channels fastest (matches T0's row layout), bf16,
    # zero-pad K and batch, group into (num_tiles, batch_tile, K0) blocks.
    x_rows = jnp.transpose(x_nchw, (0, 2, 3, 1)).reshape(n, k0).astype(jnp.bfloat16)
    x_rows = jnp.pad(x_rows, ((0, n_pad - n), (0, k0p - k0)))
    x_rows = x_rows.reshape(num_tiles, batch_tile, k0p)

    out = pl.pallas_call(
        _fused_forward_kernel,
        out_shape=jax.ShapeDtypeStruct((num_tiles, batch_tile, outp), jnp.float32),
        grid=(num_tiles,),
        in_specs=[
            pl.BlockSpec((1, batch_tile, k0p), lambda i: (i, 0, 0)),   # x (batch tile)
            pl.BlockSpec(ops["t0"].shape, lambda i: (0, 0)),           # conv0 Toeplitz
            pl.BlockSpec(ops["b0"].shape, lambda i: (0, 0)),           # conv0 bias
            pl.BlockSpec(ops["t1"].shape, lambda i: (0, 0)),           # conv1 Toeplitz
            pl.BlockSpec(ops["b1"].shape, lambda i: (0, 0)),           # conv1 bias
            pl.BlockSpec(ops["wfc0"].shape, lambda i: (0, 0)),         # fc0 weights
            pl.BlockSpec(ops["bfc0"].shape, lambda i: (0, 0)),         # fc0 bias
            pl.BlockSpec(ops["wout"].shape, lambda i: (0, 0)),         # fc_out weights
            pl.BlockSpec(ops["bout"].shape, lambda i: (0, 0)),         # fc_out bias
        ],
        out_specs=pl.BlockSpec((1, batch_tile, outp), lambda i: (i, 0, 0)),
        compiler_params=pltpu.CompilerParams(
            dimension_semantics=("parallel",),
            vmem_limit_bytes=32 * 1024 * 1024,
        ),
    )(x_rows, ops["t0"], ops["b0"], ops["t1"], ops["b1"],
      ops["wfc0"], ops["bfc0"], ops["wout"], ops["bout"])

    return out.reshape(n_pad, outp)[:n, :output_size]


# ----------------------------------------------------------------------------
# Pure-JAX f32 reference (matches the PyTorch module semantics at eval)
# ----------------------------------------------------------------------------
def _reference_forward(params, x):
    y = x
    for i in range(2):
        wc, bc = params[f"conv{i}_w"], params[f"conv{i}_b"]
        y = jax.lax.conv_general_dilated(
            y, wc, window_strides=(2, 2), padding=((1, 1), (1, 1)),
            dimension_numbers=("NCHW", "OIHW", "NCHW"))
        y = jax.nn.relu(y + bc[None, :, None, None])
    y = y.reshape(y.shape[0], -1)                      # nn.Flatten on NCHW
    y = jax.nn.relu(y @ params["fc0_w"] + params["fc0_b"])
    logits = y @ params["fc_out_w"] + params["fc_out_b"]
    return jax.nn.sigmoid(logits)


if __name__ == "__main__":
    key = jax.random.PRNGKey(0)
    k_param, k_x = jax.random.split(key)

    in_channels, in_hw = 4, 16
    enc_channels = (8, 16)
    hidden_size = (32,)
    output_size = 1

    x = jax.random.normal(k_x, (2, in_channels, in_hw, in_hw), jnp.float32)  # NCHW
    params = init_params(k_param, in_channels=in_channels,
                         enc_channels=enc_channels, in_hw=in_hw,
                         hidden_size=hidden_size, output_size=output_size)
    ops = prepare_pallas_operands(params, in_channels=in_channels,
                                  enc_channels=enc_channels, in_hw=in_hw,
                                  hidden_size=hidden_size,
                                  output_size=output_size)

    out = ba_detection_net_forward(ops, x, output_size=output_size)
    out = jax.block_until_ready(out)

    ref = _reference_forward(params, x)
    assert out.shape == (2, output_size), out.shape
    assert bool(jnp.all((out >= 0.0) & (out <= 1.0)))            # sigmoid range
    assert bool(jnp.allclose(out, ref, atol=2.5e-2)), (out, ref)  # bf16 tolerance
    print("KERNEL_OK")
</pallas_src>

<mosaic_0001>
module attributes {stable_mosaic.version = 11 : i64} {
  func.func @_fused_forward_kernel(%arg0: i32, %arg1: memref<1x1x1024xbf16, #tpu.memory_space<vmem>>, %arg2: memref<1024x512xbf16, #tpu.memory_space<vmem>>, %arg3: memref<1x512xf32, #tpu.memory_space<vmem>>, %arg4: memref<512x256xbf16, #tpu.memory_space<vmem>>, %arg5: memref<1x256xf32, #tpu.memory_space<vmem>>, %arg6: memref<256x128xbf16, #tpu.memory_space<vmem>>, %arg7: memref<1x128xf32, #tpu.memory_space<vmem>>, %arg8: memref<128x128xbf16, #tpu.memory_space<vmem>>, %arg9: memref<1x128xf32, #tpu.memory_space<vmem>>, %arg10: memref<1x1x128xf32, #tpu.memory_space<vmem>>) attributes {dimension_semantics = [#tpu.dimension_semantics<parallel>], iteration_bounds = array<i64: 2>, scalar_prefetch = 0 : i64, scratch_operands = 0 : i64, tpu.core_type = #tpu.core_type<tc>, window_params = [{transform_indices = @transform_0, window_bounds = array<i64: 1, 1, 1024>}, {pipeline_mode = #tpu.pipeline_mode<synchronous>, transform_indices = @transform_1, window_bounds = array<i64: 1024, 512>}, {pipeline_mode = #tpu.pipeline_mode<synchronous>, transform_indices = @transform_2, window_bounds = array<i64: 1, 512>}, {pipeline_mode = #tpu.pipeline_mode<synchronous>, transform_indices = @transform_3, window_bounds = array<i64: 512, 256>}, {pipeline_mode = #tpu.pipeline_mode<synchronous>, transform_indices = @transform_4, window_bounds = array<i64: 1, 256>}, {pipeline_mode = #tpu.pipeline_mode<synchronous>, transform_indices = @transform_5, window_bounds = array<i64: 256, 128>}, {pipeline_mode = #tpu.pipeline_mode<synchronous>, transform_indices = @transform_6, window_bounds = array<i64: 1, 128>}, {pipeline_mode = #tpu.pipeline_mode<synchronous>, transform_indices = @transform_7, window_bounds = array<i64: 128, 128>}, {pipeline_mode = #tpu.pipeline_mode<synchronous>, transform_indices = @transform_8, window_bounds = array<i64: 1, 128>}, {transform_indices = @transform_9, window_bounds = array<i64: 1, 1, 128>}]} {
    %c0 = arith.constant 0 : index
    %c0_0 = arith.constant 0 : index
    %c0_1 = arith.constant 0 : index
    %0 = vector.load %arg1[%c0, %c0_0, %c0_1] : memref<1x1x1024xbf16, #tpu.memory_space<vmem>>, vector<1x1x1024xbf16>
    %1 = vector.shape_cast %0 : vector<1x1x1024xbf16> to vector<1x1024xbf16>
    %c0_2 = arith.constant 0 : index
    %c0_3 = arith.constant 0 : index
    %2 = vector.load %arg2[%c0_2, %c0_3] : memref<1024x512xbf16, #tpu.memory_space<vmem>>, vector<1024x512xbf16>
    %cst = arith.constant dense<0.000000e+00> : vector<1x512xf32>
    %3 = tpu.matmul %1, %2, %cst {dimension_numbers = #tpu.dot_dimension_numbers<[1], [0], [0], [1], [0, 0, 1, 1], [], []>} : vector<1x1024xbf16>, vector<1024x512xbf16>, vector<1x512xf32> -> vector<1x512xf32>
    %c0_4 = arith.constant 0 : index
    %c0_5 = arith.constant 0 : index
    %4 = vector.load %arg3[%c0_4, %c0_5] : memref<1x512xf32, #tpu.memory_space<vmem>>, vector<1x512xf32>
    %5 = arith.addf %3, %4 : vector<1x512xf32>
    %cst_6 = arith.constant 0.000000e+00 : f32
    %6 = vector.broadcast %cst_6 : f32 to vector<1x512xf32>
    %7 = arith.maximumf %5, %6 : vector<1x512xf32>
    %8 = arith.truncf %7 : vector<1x512xf32> to vector<1x512xbf16>
    %c0_7 = arith.constant 0 : index
    %c0_8 = arith.constant 0 : index
    %9 = vector.load %arg4[%c0_7, %c0_8] : memref<512x256xbf16, #tpu.memory_space<vmem>>, vector<512x256xbf16>
    %cst_9 = arith.constant dense<0.000000e+00> : vector<1x256xf32>
    %10 = tpu.matmul %8, %9, %cst_9 {dimension_numbers = #tpu.dot_dimension_numbers<[1], [0], [0], [1], [0, 0, 1, 1], [], []>} : vector<1x512xbf16>, vector<512x256xbf16>, vector<1x256xf32> -> vector<1x256xf32>
    %c0_10 = arith.constant 0 : index
    %c0_11 = arith.constant 0 : index
    %11 = vector.load %arg5[%c0_10, %c0_11] : memref<1x256xf32, #tpu.memory_space<vmem>>, vector<1x256xf32>
    %12 = arith.addf %10, %11 : vector<1x256xf32>
    %cst_12 = arith.constant 0.000000e+00 : f32
    %13 = vector.broadcast %cst_12 : f32 to vector<1x256xf32>
    %14 = arith.maximumf %12, %13 : vector<1x256xf32>
    %15 = arith.truncf %14 : vector<1x256xf32> to vector<1x256xbf16>
    %c0_13 = arith.constant 0 : index
    %c0_14 = arith.constant 0 : index
    %16 = vector.load %arg6[%c0_13, %c0_14] : memref<256x128xbf16, #tpu.memory_space<vmem>>, vector<256x128xbf16>
    %cst_15 = arith.constant dense<0.000000e+00> : vector<1x128xf32>
    %17 = tpu.matmul %15, %16, %cst_15 {dimension_numbers = #tpu.dot_dimension_numbers<[1], [0], [0], [1], [0, 0, 1, 1], [], []>} : vector<1x256xbf16>, vector<256x128xbf16>, vector<1x128xf32> -> vector<1x128xf32>
    %c0_16 = arith.constant 0 : index
    %c0_17 = arith.constant 0 : index
    %18 = vector.load %arg7[%c0_16, %c0_17] : memref<1x128xf32, #tpu.memory_space<vmem>>, vector<1x128xf32>
    %19 = arith.addf %17, %18 : vector<1x128xf32>
    %cst_18 = arith.constant 0.000000e+00 : f32
    %20 = vector.broadcast %cst_18 : f32 to vector<1x128xf32>
    %21 = arith.maximumf %19, %20 : vector<1x128xf32>
    %22 = arith.truncf %21 : vector<1x128xf32> to vector<1x128xbf16>
    %c0_19 = arith.constant 0 : index
    %c0_20 = arith.constant 0 : index
    %23 = vector.load %arg8[%c0_19, %c0_20] : memref<128x128xbf16, #tpu.memory_space<vmem>>, vector<128x128xbf16>
    %cst_21 = arith.constant dense<0.000000e+00> : vector<1x128xf32>
    %24 = tpu.matmul %22, %23, %cst_21 {dimension_numbers = #tpu.dot_dimension_numbers<[1], [0], [0], [1], [0, 0, 1, 1], [], []>} : vector<1x128xbf16>, vector<128x128xbf16>, vector<1x128xf32> -> vector<1x128xf32>
    %c0_22 = arith.constant 0 : index
    %c0_23 = arith.constant 0 : index
    %25 = vector.load %arg9[%c0_22, %c0_23] : memref<1x128xf32, #tpu.memory_space<vmem>>, vector<1x128xf32>
    %26 = arith.addf %24, %25 : vector<1x128xf32>
    %cst_24 = arith.constant 0.000000e+00 : f32
    %27 = vector.broadcast %cst_24 : f32 to vector<1x128xf32>
    %28 = arith.subf %27, %26 : vector<1x128xf32>
    %29 = math.exp %28 : vector<1x128xf32>
    %cst_25 = arith.constant 1.000000e+00 : f32
    %30 = vector.broadcast %cst_25 : f32 to vector<1x128xf32>
    %31 = arith.addf %30, %29 : vector<1x128xf32>
    %cst_26 = arith.constant 1.000000e+00 : f32
    %32 = vector.broadcast %cst_26 : f32 to vector<1x128xf32>
    %33 = arith.divf %32, %31 : vector<1x128xf32>
    %c0_27 = arith.constant 0 : index
    %c0_28 = arith.constant 0 : index
    %c0_29 = arith.constant 0 : index
    %34 = vector.load %arg10[%c0_27, %c0_28, %c0_29] : memref<1x1x128xf32, #tpu.memory_space<vmem>>, vector<1x1x128xf32>
    %35 = vector.shape_cast %34 : vector<1x1x128xf32> to vector<1x128xf32>
    %36 = vector.shape_cast %33 : vector<1x128xf32> to vector<1x1x128xf32>
    tpu.vector_store %arg10[%c0_27, %c0_28, %c0_29], %36 {strides = array<i32>} : memref<1x1x128xf32, #tpu.memory_space<vmem>>, vector<1x1x128xf32>,
    return
  }
  func.func @transform_0(%arg0: i32) -> (i32, i32, i32) {
    %c0_i32 = arith.constant 0 : i32
    %c0_i32_0 = arith.constant 0 : i32
    %c0_i32_1 = arith.constant 0 : i32
    return %arg0, %c0_i32, %c0_i32_0 : i32, i32, i32
  }
  func.func @transform_1(%arg0: i32) -> (i32, i32) {
    %c0_i32 = arith.constant 0 : i32
    %c0_i32_0 = arith.constant 0 : i32
    %c0_i32_1 = arith.constant 0 : i32
    return %c0_i32, %c0_i32_0 : i32, i32
  }
  func.func @transform_2(%arg0: i32) -> (i32, i32) {
    %c0_i32 = arith.constant 0 : i32
    %c0_i32_0 = arith.constant 0 : i32
    %c0_i32_1 = arith.constant 0 : i32
    return %c0_i32, %c0_i32_0 : i32, i32
  }
  func.func @transform_3(%arg0: i32) -> (i32, i32) {
    %c0_i32 = arith.constant 0 : i32
    %c0_i32_0 = arith.constant 0 : i32
    %c0_i32_1 = arith.constant 0 : i32
    return %c0_i32, %c0_i32_0 : i32, i32
  }
  func.func @transform_4(%arg0: i32) -> (i32, i32) {
    %c0_i32 = arith.constant 0 : i32
    %c0_i32_0 = arith.constant 0 : i32
    %c0_i32_1 = arith.constant 0 : i32
    return %c0_i32, %c0_i32_0 : i32, i32
  }
  func.func @transform_5(%arg0: i32) -> (i32, i32) {
    %c0_i32 = arith.constant 0 : i32
    %c0_i32_0 = arith.constant 0 : i32
    %c0_i32_1 = arith.constant 0 : i32
    return %c0_i32, %c0_i32_0 : i32, i32
  }
  func.func @transform_6(%arg0: i32) -> (i32, i32) {
    %c0_i32 = arith.constant 0 : i32
    %c0_i32_0 = arith.constant 0 : i32
    %c0_i32_1 = arith.constant 0 : i32
    return %c0_i32, %c0_i32_0 : i32, i32
  }
  func.func @transform_7(%arg0: i32) -> (i32, i32) {
    %c0_i32 = arith.constant 0 : i32
    %c0_i32_0 = arith.constant 0 : i32
    %c0_i32_1 = arith.constant 0 : i32
    return %c0_i32, %c0_i32_0 : i32, i32
  }
  func.func @transform_8(%arg0: i32) -> (i32, i32) {
    %c0_i32 = arith.constant 0 : i32
    %c0_i32_0 = arith.constant 0 : i32
    %c0_i32_1 = arith.constant 0 : i32
    return %c0_i32, %c0_i32_0 : i32, i32
  }
  func.func @transform_9(%arg0: i32) -> (i32, i32, i32) {
    %c0_i32 = arith.constant 0 : i32
    %c0_i32_0 = arith.constant 0 : i32
    %c0_i32_1 = arith.constant 0 : i32
    return %arg0, %c0_i32, %c0_i32_0 : i32, i32, i32
  }
}

</mosaic_0001>

<llo_original>
// kernel: ba_detection_net_forward.1
$region0: #{ba_detection_net_forward.1}
  #allocation0 [shape = 'u32[]', space=smem, size = 0x4, offset = 0x4, fixed_abs, tag = 'smem constant byte address 0x4 - core index']
  #allocation1 [shape = 'u32[144,128]{1,0:T(1,128)}', space=vmem, size = 0x12000, scoped, tag = 'internal scratch']
  %s0 = inlined_call_operand.vmem [shape: bf16[2,1,1024], index: 0, kind: input, shape index: {}]
  %s1 = inlined_call_operand.hbm [shape: bf16[1024,512], index: 1, kind: input, shape index: {}]
  %s2 = inlined_call_operand.vmem [shape: f32[1,512], index: 2, kind: input, shape index: {}]
  %s3 = inlined_call_operand.vmem [shape: bf16[512,256], index: 3, kind: input, shape index: {}]
  %s4 = inlined_call_operand.vmem [shape: f32[1,256], index: 4, kind: input, shape index: {}]
  %s5 = inlined_call_operand.vmem [shape: bf16[256,128], index: 5, kind: input, shape index: {}]
  %s6 = inlined_call_operand.vmem [shape: f32[1,128], index: 6, kind: input, shape index: {}]
  %s7 = inlined_call_operand.vmem [shape: bf16[128,128], index: 7, kind: input, shape index: {}]
  %s8 = inlined_call_operand.vmem [shape: f32[1,128], index: 8, kind: input, shape index: {}]
  %s9 = inlined_call_operand.vmem [shape: f32[2,1,128], index: 9, kind: output, shape index: {}]
  %s10 = sld [smem:[#allocation0]]
  $region73: #{ba_detection_net_forward.1} parent=0
    _
  %s12 = ssub.s32 1, %s10
  %s13 = scalar_select 0, %s12, %s10
  $region1: #{ba_detection_net_forward.1} parent=0
    #allocation2 [shape = 'u8[1048576]{0}', space=vmem, size = 0x100000, scoped, tag = 'input window, operand 1, single buffered']
    #allocation3 [shape = 's32[2]{0}', space=sflag, size = 0x8, scoped, tag = 'scoped memory for ba_detection_net_forward.1']
    %14 = vsyncpa [#allocation3], 0
    loop: start=0, step=1, limit=4
    $region2: #{ba_detection_net_forward.1} parent=1 // loop_pre_header
      _
    $region3: #{ba_detection_net_forward.1} parent=1 // loop_header
      %s16 = sphi 0, %s20
      %p17 = scmp.ge.s32.totalorder %s16, 4
      %s26 = sphi 0, %s28
      %s29 = sphi 0, %s26
      %s30 = sphi 0, %s29
      %s46 = sphi 0, %s30
      %s50 = sphi 0, %s50
      %s52 = sphi 0, %s50
      %s53 = sphi 0, %s52
      %s67 = sphi 0, %s53
      %s71 = sphi 0, %s71
      %s73 = sphi 0, %s71
      %s74 = sphi 0, %s73
      %s88 = sphi 0, %s74
      %s92 = sphi 0, %s92
      %s94 = sphi 0, %s92
      %s95 = sphi 0, %s94
      %s109 = sphi 0, %s95
      %s113 = sphi 0, %s113
      %s115 = sphi 0, %s113
      %s116 = sphi 0, %s115
      %s130 = sphi 0, %s116
      %s134 = sphi 0, %s134
      %s136 = sphi 0, %s134
      %s137 = sphi 0, %s136
      %s151 = sphi 0, %s137
      %s155 = sphi 0, %s155
      %s157 = sphi 0, %s155
      %s158 = sphi 0, %s157
      %s172 = sphi 0, %s158
      %s176 = sphi 0, %s176
      %s178 = sphi 0, %s176
      %s179 = sphi 0, %s178
      %s193 = sphi 0, %s179
      %s197 = sphi 0, %s197
      %s199 = sphi 0, %s197
      %s200 = sphi 0, %s199
      %s214 = sphi 0, %s200
      %s220 = sphi 0, %s222
      %s223 = sphi 0, %s220
      %s224 = sphi 0, %s223
      %s240 = sphi 0, %s224
    $region4: #{ba_detection_net_forward.1} parent=1 // loop_header_branch
      %19 = sbr.rel (%p17) target = $region8
    $region5: #{ba_detection_net_forward.1} parent=1 // loop_body
      %s21 = ssub.s32 %s16, 1
      %s22 = ssub.s32 %s16, 2
      %s23 = sadd.s32 %s16, 1
      %s24 = ssub.s32 %s16, %s23
      %p25 = scmp.eq.s32.totalorder %s24, 0
      %s27 = sadd.s32 %s26, 1
      %s28 = scalar_select %p25, %s26, %s27
      %p31 = pneg %p25
      %p32 = scmp.eq.s32.totalorder %s16, 1
      %p33 = por %p31, %p32
      %p34 = scmp.ne.s32.totalorder %s26, %s29
      %p35 = scmp.eq.s32.totalorder %s16, 0
      %p36 = por %p34, %p35
      %p37 = scmp.ne.s32.totalorder %s26, %s29
      %p38 = scmp.eq.s32.totalorder %s21, 1
      %p39 = por %p37, %p38
      %p40 = scmp.ne.s32.totalorder %s29, %s30
      %p41 = scmp.eq.s32.totalorder %s21, 0
      %p42 = por %p40, %p41
      %p43 = scmp.ne.s32.totalorder %s29, %s30
      %p44 = scmp.eq.s32.totalorder %s22, 1
      %p45 = por %p43, %p44
      %p47 = scmp.ne.s32.totalorder %s30, %s46
      %p48 = scmp.eq.s32.totalorder %s22, 0
      %p49 = por %p47, %p48
      %s51 = sadd.s32 %s50, 1
      %p54 = scmp.eq.s32.totalorder %s16, 1
      %p55 = scmp.ne.s32.totalorder %s50, %s52
      %p56 = scmp.eq.s32.totalorder %s16, 0
      %p57 = por %p55, %p56
      %p58 = scmp.ne.s32.totalorder %s50, %s52
      %p59 = scmp.eq.s32.totalorder %s21, 1
      %p60 = por %p58, %p59
      %p61 = scmp.ne.s32.totalorder %s52, %s53
      %p62 = scmp.eq.s32.totalorder %s21, 0
      %p63 = por %p61, %p62
      %p64 = scmp.ne.s32.totalorder %s52, %s53
      %p65 = scmp.eq.s32.totalorder %s22, 1
      %p66 = por %p64, %p65
      %p68 = scmp.ne.s32.totalorder %s53, %s67
      %p69 = scmp.eq.s32.totalorder %s22, 0
      %p70 = por %p68, %p69
      %s72 = sadd.s32 %s71, 1
      %p75 = scmp.eq.s32.totalorder %s16, 1
      %p76 = scmp.ne.s32.totalorder %s71, %s73
      %p77 = scmp.eq.s32.totalorder %s16, 0
      %p78 = por %p76, %p77
      %p79 = scmp.ne.s32.totalorder %s71, %s73
      %p80 = scmp.eq.s32.totalorder %s21, 1
      %p81 = por %p79, %p80
      %p82 = scmp.ne.s32.totalorder %s73, %s74
      %p83 = scmp.eq.s32.totalorder %s21, 0
      %p84 = por %p82, %p83
      %p85 = scmp.ne.s32.totalorder %s73, %s74
      %p86 = scmp.eq.s32.totalorder %s22, 1
      %p87 = por %p85, %p86
      %p89 = scmp.ne.s32.totalorder %s74, %s88
      %p90 = scmp.eq.s32.totalorder %s22, 0
      %p91 = por %p89, %p90
      %s93 = sadd.s32 %s92, 1
      %p96 = scmp.eq.s32.totalorder %s16, 1
      %p97 = scmp.ne.s32.totalorder %s92, %s94
      %p98 = scmp.eq.s32.totalorder %s16, 0
      %p99 = por %p97, %p98
      %p100 = scmp.ne.s32.totalorder %s92, %s94
      %p101 = scmp.eq.s32.totalorder %s21, 1
      %p102 = por %p100, %p101
      %p103 = scmp.ne.s32.totalorder %s94, %s95
      %p104 = scmp.eq.s32.totalorder %s21, 0
      %p105 = por %p103, %p104
      %p106 = scmp.ne.s32.totalorder %s94, %s95
      %p107 = scmp.eq.s32.totalorder %s22, 1
      %p108 = por %p106, %p107
      %p110 = scmp.ne.s32.totalorder %s95, %s109
      %p111 = scmp.eq.s32.totalorder %s22, 0
      %p112 = por %p110, %p111
      %s114 = sadd.s32 %s113, 1
      %p117 = scmp.eq.s32.totalorder %s16, 1
      %p118 = scmp.ne.s32.totalorder %s113, %s115
      %p119 = scmp.eq.s32.totalorder %s16, 0
      %p120 = por %p118, %p119
      %p121 = scmp.ne.s32.totalorder %s113, %s115
      %p122 = scmp.eq.s32.totalorder %s21, 1
      %p123 = por %p121, %p122
      %p124 = scmp.ne.s32.totalorder %s115, %s116
      %p125 = scmp.eq.s32.totalorder %s21, 0
      %p126 = por %p124, %p125
      %p127 = scmp.ne.s32.totalorder %s115, %s116
      %p128 = scmp.eq.s32.totalorder %s22, 1
      %p129 = por %p127, %p128
      %p131 = scmp.ne.s32.totalorder %s116, %s130
      %p132 = scmp.eq.s32.totalorder %s22, 0
      %p133 = por %p131, %p132
      %s135 = sadd.s32 %s134, 1
      %p138 = scmp.eq.s32.totalorder %s16, 1
      %p139 = scmp.ne.s32.totalorder %s134, %s136
      %p140 = scmp.eq.s32.totalorder %s16, 0
      %p141 = por %p139, %p140
      %p142 = scmp.ne.s32.totalorder %s134, %s136
      %p143 = scmp.eq.s32.totalorder %s21, 1
      %p144 = por %p142, %p143
      %p145 = scmp.ne.s32.totalorder %s136, %s137
      %p146 = scmp.eq.s32.totalorder %s21, 0
      %p147 = por %p145, %p146
      %p148 = scmp.ne.s32.totalorder %s136, %s137
      %p149 = scmp.eq.s32.totalorder %s22, 1
      %p150 = por %p148, %p149
      %p152 = scmp.ne.s32.totalorder %s137, %s151
      %p153 = scmp.eq.s32.totalorder %s22, 0
      %p154 = por %p152, %p153
      %s156 = sadd.s32 %s155, 1
      %p159 = scmp.eq.s32.totalorder %s16, 1
      %p160 = scmp.ne.s32.totalorder %s155, %s157
      %p161 = scmp.eq.s32.totalorder %s16, 0
      %p162 = por %p160, %p161
      %p163 = scmp.ne.s32.totalorder %s155, %s157
      %p164 = scmp.eq.s32.totalorder %s21, 1
      %p165 = por %p163, %p164
      %p166 = scmp.ne.s32.totalorder %s157, %s158
      %p167 = scmp.eq.s32.totalorder %s21, 0
      %p168 = por %p166, %p167
      %p169 = scmp.ne.s32.totalorder %s157, %s158
      %p170 = scmp.eq.s32.totalorder %s22, 1
      %p171 = por %p169, %p170
      %p173 = scmp.ne.s32.totalorder %s158, %s172
      %p174 = scmp.eq.s32.totalorder %s22, 0
      %p175 = por %p173, %p174
      %s177 = sadd.s32 %s176, 1
      %p180 = scmp.eq.s32.totalorder %s16, 1
      %p181 = scmp.ne.s32.totalorder %s176, %s178
      %p182 = scmp.eq.s32.totalorder %s16, 0
      %p183 = por %p181, %p182
      %p184 = scmp.ne.s32.totalorder %s176, %s178
      %p185 = scmp.eq.s32.totalorder %s21, 1
      %p186 = por %p184, %p185
      %p187 = scmp.ne.s32.totalorder %s178, %s179
      %p188 = scmp.eq.s32.totalorder %s21, 0
      %p189 = por %p187, %p188
      %p190 = scmp.ne.s32.totalorder %s178, %s179
      %p191 = scmp.eq.s32.totalorder %s22, 1
      %p192 = por %p190, %p191
      %p194 = scmp.ne.s32.totalorder %s179, %s193
      %p195 = scmp.eq.s32.totalorder %s22, 0
      %p196 = por %p194, %p195
      %s198 = sadd.s32 %s197, 1
      %p201 = scmp.eq.s32.totalorder %s16, 1
      %p202 = scmp.ne.s32.totalorder %s197, %s199
      %p203 = scmp.eq.s32.totalorder %s16, 0
      %p204 = por %p202, %p203
      %p205 = scmp.ne.s32.totalorder %s197, %s199
      %p206 = scmp.eq.s32.totalorder %s21, 1
      %p207 = por %p205, %p206
      %p208 = scmp.ne.s32.totalorder %s199, %s200
      %p209 = scmp.eq.s32.totalorder %s21, 0
      %p210 = por %p208, %p209
      %p211 = scmp.ne.s32.totalorder %s199, %s200
      %p212 = scmp.eq.s32.totalorder %s22, 1
      %p213 = por %p211, %p212
      %p215 = scmp.ne.s32.totalorder %s200, %s214
      %p216 = scmp.eq.s32.totalorder %s22, 0
      %p217 = por %p215, %p216
      %s218 = ssub.s32 %s16, %s23
      %p219 = scmp.eq.s32.totalorder %s218, 0
      %s221 = sadd.s32 %s220, 1
      %s222 = scalar_select %p219, %s220, %s221
      %p225 = pneg %p219
      %p226 = scmp.eq.s32.totalorder %s16, 1
      %p227 = por %p225, %p226
      %p228 = scmp.ne.s32.totalorder %s220, %s223
      %p229 = scmp.eq.s32.totalorder %s16, 0
      %p230 = por %p228, %p229
      %p231 = scmp.ne.s32.totalorder %s220, %s223
      %p232 = scmp.eq.s32.totalorder %s21, 1
      %p233 = por %p231, %p232
      %p234 = scmp.ne.s32.totalorder %s223, %s224
      %p235 = scmp.eq.s32.totalorder %s21, 0
      %p236 = por %p234, %p235
      %p237 = scmp.ne.s32.totalorder %s223, %s224
      %p238 = scmp.eq.s32.totalorder %s22, 1
      %p239 = por %p237, %p238
      %p241 = scmp.ne.s32.totalorder %s224, %s240
      %p242 = scmp.eq.s32.totalorder %s22, 0
      %p243 = por %p241, %p242
      %p244 = scmp.le.s32.totalorder 1, %s16
      %p245 = scmp.lt.s32.totalorder %s16, 3
      %p246 = pnand %p244, %p245
      %p247 = pneg %p246
      // Predicated region
      $region9: #{ba_detection_net_forward.1} parent=5 // pred_check
        _
      $region10: #{ba_detection_net_forward.1} parent=5 // pred_check_branch
        %249 = sbr.rel (%p246) target = $region12
      $region11: #{ba_detection_net_forward.1} parent=5 // pred_region
        %s250 = ssub.s32 %s16, 1
        // Predicated region
        $region13: #{ba_detection_net_forward.1} parent=11 // pred_check
          %p251 = pneg %p63
        $region14: #{ba_detection_net_forward.1} parent=11 // pred_check_branch
          %253 = sbr.rel (%p251) target = $region16
        $region15: #{ba_detection_net_forward.1} parent=11 // pred_region
          %s255 = ssub.s32 32768, 32768
          %256 = vsyncadd [#allocation3], %s255
          %s257 = sshll.u32 [#allocation2], 4
          %s258 = int_to_ptr.vmem [resolvable:$true] %s257
          %263 = dma.hbm_to_vmem [thread:$0]  %s1, 32768, %s258, [#allocation3], 256, 256, 16
        $region16: #{ba_detection_net_forward.1} parent=11 // pred_fallthru
          _
        // Predicated region
        $region17: #{ba_detection_net_forward.1} parent=11 // pred_check
          %p264 = pneg %p84
        $region18: #{ba_detection_net_forward.1} parent=11 // pred_check_branch
          %266 = sbr.rel (%p264) target = $region20
        $region19: #{ba_detection_net_forward.1} parent=11 // pred_region
          _
        $region20: #{ba_detection_net_forward.1} parent=11 // pred_fallthru
          _
        // Predicated region
        $region21: #{ba_detection_net_forward.1} parent=11 // pred_check
          %p267 = pneg %p105
        $region22: #{ba_detection_net_forward.1} parent=11 // pred_check_branch
          %269 = sbr.rel (%p267) target = $region24
        $region23: #{ba_detection_net_forward.1} parent=11 // pred_region
          _
        $region24: #{ba_detection_net_forward.1} parent=11 // pred_fallthru
          _
        // Predicated region
        $region25: #{ba_detection_net_forward.1} parent=11 // pred_check
          %p270 = pneg %p126
        $region26: #{ba_detection_net_forward.1} parent=11 // pred_check_branch
          %272 = sbr.rel (%p270) target = $region28
        $region27: #{ba_detection_net_forward.1} parent=11 // pred_region
          _
        $region28: #{ba_detection_net_forward.1} parent=11 // pred_fallthru
          _
        // Predicated region
        $region29: #{ba_detection_net_forward.1} parent=11 // pred_check
          %p273 = pneg %p147
        $region30: #{ba_detection_net_forward.1} parent=11 // pred_check_branch
          %275 = sbr.rel (%p273) target = $region32
        $region31: #{ba_detection_net_forward.1} parent=11 // pred_region
          _
        $region32: #{ba_detection_net_forward.1} parent=11 // pred_fallthru
          _
        // Predicated region
        $region33: #{ba_detection_net_forward.1} parent=11 // pred_check
          %p276 = pneg %p168
        $region34: #{ba_detection_net_forward.1} parent=11 // pred_check_branch
          %278 = sbr.rel (%p276) target = $region36
        $region35: #{ba_detection_net_forward.1} parent=11 // pred_region
          _
        $region36: #{ba_detection_net_forward.1} parent=11 // pred_fallthru
          _
        // Predicated region
        $region37: #{ba_detection_net_forward.1} parent=11 // pred_check
          %p279 = pneg %p189
        $region38: #{ba_detection_net_forward.1} parent=11 // pred_check_branch
          %281 = sbr.rel (%p279) target = $region40
        $region39: #{ba_detection_net_forward.1} parent=11 // pred_region
          _
        $region40: #{ba_detection_net_forward.1} parent=11 // pred_fallthru
          _
        // Predicated region
        $region41: #{ba_detection_net_forward.1} parent=11 // pred_check
          %p282 = pneg %p210
        $region42: #{ba_detection_net_forward.1} parent=11 // pred_check_branch
          %284 = sbr.rel (%p282) target = $region44
        $region43: #{ba_detection_net_forward.1} parent=11 // pred_region
          _
        $region44: #{ba_detection_net_forward.1} parent=11 // pred_fallthru
          _
      $region12: #{ba_detection_net_forward.1} parent=5 // pred_fallthru
        _
      %p285 = scmp.lt.s32.totalorder %s16, 2
      // Predicated region
      $region45: #{ba_detection_net_forward.1} parent=5 // pred_check
        %p286 = pneg %p285
      $region46: #{ba_detection_net_forward.1} parent=5 // pred_check_branch
        %288 = sbr.rel (%p286) target = $region48
      $region47: #{ba_detection_net_forward.1} parent=5 // pred_region
        // Predicated region
        $region49: #{ba_detection_net_forward.1} parent=47 // pred_check
          %p289 = pneg %p36
        $region50: #{ba_detection_net_forward.1} parent=47 // pred_check_branch
          %291 = sbr.rel (%p289) target = $region52
        $region51: #{ba_detection_net_forward.1} parent=47 // pred_region
          %p292 = scmp.lt.s32.totalorder %s16, 1
          %s293 = scalar_select %p292, %s16, 1
          %s294 = smul.addr %s293, 8
          %s295 = scalar_lea.vmem %s0, %s294
        $region52: #{ba_detection_net_forward.1} parent=47 // pred_fallthru
          _
      $region48: #{ba_detection_net_forward.1} parent=5 // pred_fallthru
        _
      %p296 = scmp.le.s32.totalorder 1, %s16
      %p297 = scmp.lt.s32.totalorder %s16, 3
      %p298 = pnand %p296, %p297
      %p299 = pneg %p298
      // Predicated region
      $region53: #{ba_detection_net_forward.1} parent=5 // pred_check
        _
      $region54: #{ba_detection_net_forward.1} parent=5 // pred_check_branch
        %301 = sbr.rel (%p298) target = $region56
      $region55: #{ba_detection_net_forward.1} parent=5 // pred_region
        %s302 = ssub.s32 %s16, 1
        // Predicated region
        $region57: #{ba_detection_net_forward.1} parent=55 // pred_check
          %p303 = pneg %p63
        $region58: #{ba_detection_net_forward.1} parent=55 // pred_check_branch
          %305 = sbr.rel (%p303) target = $region60
        $region59: #{ba_detection_net_forward.1} parent=55 // pred_region
          %306 = dma.done [#allocation3], 32768
        $region60: #{ba_detection_net_forward.1} parent=55 // pred_fallthru
          _
        %p307 = scmp.lt.s32.totalorder %s21, 1
        %s308 = scalar_select %p307, %s21, 1
        %s309 = smul.addr %s308, 8
        %s310 = scalar_lea.vmem %s0, %s309
        %p311 = pneg %p42
        %p312 = pneg %p39
        %p313 = pneg %p63
        %p314 = pneg %p60
        %p315 = pneg %p84
        %p316 = pneg %p81
        %p317 = pneg %p105
        %p318 = pneg %p102
        %p319 = pneg %p126
        %p320 = pneg %p123
        %p321 = pneg %p147
        %p322 = pneg %p144
        %p323 = pneg %p168
        %p324 = pneg %p165
        %p325 = pneg %p189
        %p326 = pneg %p186
        %p327 = pneg %p210
        %p328 = pneg %p207
        %p329 = pneg %p236
        %p330 = pneg %p233
        %p331 = scmp.lt.s32.totalorder %s21, 1
        %s332 = scalar_select %p331, %s21, 1
        %s333 = scalar_lea.vmem %s9, %s332
        %p334 = scmp.lt.s32.totalorder %s21, 1
        %s335 = scalar_select %p334, %s21, 1
        %s336 = smul.addr %s335, 8
        %s337 = scalar_lea.vmem %s0, %s336
        %p338 = scmp.lt.s32.totalorder %s21, 1
        %s339 = scalar_select %p338, %s21, 1
        %s340 = scalar_lea.vmem %s9, %s339
        %v342 = vld [vmem:[%s337] sm:$0xff]
        %v343 = vld [vmem:[#allocation2] sm:$0xff]
        %v344 = vld [vmem:[#allocation2 + $0x8] sm:$0xff]
        %v345 = vld [vmem:[#allocation2 + $0x10] sm:$0xff]
        %v346 = vld [vmem:[#allocation2 + $0x18] sm:$0xff]
        %v347 = vld [vmem:[#allocation2 + $0x20] sm:$0xff]
        %v348 = vld [vmem:[#allocation2 + $0x28] sm:$0xff]
        %v349 = vld [vmem:[#allocation2 + $0x30] sm:$0xff]
        %v350 = vld [vmem:[#allocation2 + $0x38] sm:$0xff]
        %v351 = vld [vmem:[#allocation2 + $0x40] sm:$0xff]
        %v352 = vld [vmem:[#allocation2 + $0x48] sm:$0xff]
        %v353 = vld [vmem:[#allocation2 + $0x50] sm:$0xff]
        %v354 = vld [vmem:[#allocation2 + $0x58] sm:$0xff]
        %v355 = vld [vmem:[#allocation2 + $0x60] sm:$0xff]
        %v356 = vld [vmem:[#allocation2 + $0x68] sm:$0xff]
        %v357 = vld [vmem:[#allocation2 + $0x70] sm:$0xff]
        %v358 = vld [vmem:[#allocation2 + $0x78] sm:$0xff]
        %v359 = vld [vmem:[#allocation2 + $0x80] sm:$0xff]
        %v360 = vld [vmem:[#allocation2 + $0x88] sm:$0xff]
        %v361 = vld [vmem:[#allocation2 + $0x90] sm:$0xff]
        %v362 = vld [vmem:[#allocation2 + $0x98] sm:$0xff]
        %v363 = vld [vmem:[#allocation2 + $0xa0] sm:$0xff]
        %v364 = vld [vmem:[#allocation2 + $0xa8] sm:$0xff]
        %v365 = vld [vmem:[#allocation2 + $0xb0] sm:$0xff]
        %v366 = vld [vmem:[#allocation2 + $0xb8] sm:$0xff]
        %v367 = vld [vmem:[#allocation2 + $0xc0] sm:$0xff]
        %v368 = vld [vmem:[#allocation2 + $0xc8] sm:$0xff]
        %v369 = vld [vmem:[#allocation2 + $0xd0] sm:$0xff]
        %v370 = vld [vmem:[#allocation2 + $0xd8] sm:$0xff]
        %v371 = vld [vmem:[#allocation2 + $0xe0] sm:$0xff]
        %v372 = vld [vmem:[#allocation2 + $0xe8] sm:$0xff]
        %v373 = vld [vmem:[#allocation2 + $0xf0] sm:$0xff]
        %v374 = vld [vmem:[#allocation2 + $0xf8] sm:$0xff]
        %v375 = vld [vmem:[#allocation2 + $0x100] sm:$0xff]
        %v376 = vld [vmem:[#allocation2 + $0x108] sm:$0xff]
        %v377 = vld [vmem:[#allocation2 + $0x110] sm:$0xff]
        %v378 = vld [vmem:[#allocation2 + $0x118] sm:$0xff]
        %v379 = vld [vmem:[#allocation2 + $0x120] sm:$0xff]
        %v380 = vld [vmem:[#allocation2 + $0x128] sm:$0xff]
        %v381 = vld [vmem:[#allocation2 + $0x130] sm:$0xff]
        %v382 = vld [vmem:[#allocation2 + $0x138] sm:$0xff]
        %v383 = vld [vmem:[#allocation2 + $0x140] sm:$0xff]
        %v384 = vld [vmem:[#allocation2 + $0x148] sm:$0xff]
        %v385 = vld [vmem:[#allocation2 + $0x150] sm:$0xff]
        %v386 = vld [vmem:[#allocation2 + $0x158] sm:$0xff]
        %v387 = vld [vmem:[#allocation2 + $0x160] sm:$0xff]
        %v388 = vld [vmem:[#allocation2 + $0x168] sm:$0xff]
        %v389 = vld [vmem:[#allocation2 + $0x170] sm:$0xff]
        %v390 = vld [vmem:[#allocation2 + $0x178] sm:$0xff]
        %v391 = vld [vmem:[#allocation2 + $0x180] sm:$0xff]
        %v392 = vld [vmem:[#allocation2 + $0x188] sm:$0xff]
        %v393 = vld [vmem:[#allocation2 + $0x190] sm:$0xff]
        %v394 = vld [vmem:[#allocation2 + $0x198] sm:$0xff]
        %v395 = vld [vmem:[#allocation2 + $0x1a0] sm:$0xff]
        %v396 = vld [vmem:[#allocation2 + $0x1a8] sm:$0xff]
        %v397 = vld [vmem:[#allocation2 + $0x1b0] sm:$0xff]
        %v398 = vld [vmem:[#allocation2 + $0x1b8] sm:$0xff]
        %v399 = vld [vmem:[#allocation2 + $0x1c0] sm:$0xff]
        %v400 = vld [vmem:[#allocation2 + $0x1c8] sm:$0xff]
        %v401 = vld [vmem:[#allocation2 + $0x1d0] sm:$0xff]
        %v402 = vld [vmem:[#allocation2 + $0x1d8] sm:$0xff]
        %v403 = vld [vmem:[#allocation2 + $0x1e0] sm:$0xff]
        %v404 = vld [vmem:[#allocation2 + $0x1e8] sm:$0xff]
        %v405 = vld [vmem:[#allocation2 + $0x1f0] sm:$0xff]
        %v406 = vld [vmem:[#allocation2 + $0x1f8] sm:$0xff]
        %v407 = vld [vmem:[#allocation2 + $0x200] sm:$0xff]
        %v408 = vld [vmem:[#allocation2 + $0x208] sm:$0xff]
        %v409 = vld [vmem:[#allocation2 + $0x210] sm:$0xff]
        %v410 = vld [vmem:[#allocation2 + $0x218] sm:$0xff]
        %v411 = vld [vmem:[#allocation2 + $0x220] sm:$0xff]
        %v412 = vld [vmem:[#allocation2 + $0x228] sm:$0xff]
        %v413 = vld [vmem:[#allocation2 + $0x230] sm:$0xff]
        %v414 = vld [vmem:[#allocation2 + $0x238] sm:$0xff]
        %v415 = vld [vmem:[#allocation2 + $0x240] sm:$0xff]
        %v416 = vld [vmem:[#allocation2 + $0x248] sm:$0xff]
        %v417 = vld [vmem:[#allocation2 + $0x250] sm:$0xff]
        %v418 = vld [vmem:[#allocation2 + $0x258] sm:$0xff]
        %v419 = vld [vmem:[#allocation2 + $0x260] sm:$0xff]
        %v420 = vld [vmem:[#allocation2 + $0x268] sm:$0xff]
        %v421 = vld [vmem:[#allocation2 + $0x270] sm:$0xff]
        %v422 = vld [vmem:[#allocation2 + $0x278] sm:$0xff]
        %v423 = vld [vmem:[#allocation2 + $0x280] sm:$0xff]
        %v424 = vld [vmem:[#allocation2 + $0x288] sm:$0xff]
        %v425 = vld [vmem:[#allocation2 + $0x290] sm:$0xff]
        %v426 = vld [vmem:[#allocation2 + $0x298] sm:$0xff]
        %v427 = vld [vmem:[#allocation2 + $0x2a0] sm:$0xff]
        %v428 = vld [vmem:[#allocation2 + $0x2a8] sm:$0xff]
        %v429 = vld [vmem:[#allocation2 + $0x2b0] sm:$0xff]
        %v430 = vld [vmem:[#allocation2 + $0x2b8] sm:$0xff]
        %v431 = vld [vmem:[#allocation2 + $0x2c0] sm:$0xff]
        %v432 = vld [vmem:[#allocation2 + $0x2c8] sm:$0xff]
        %v433 = vld [vmem:[#allocation2 + $0x2d0] sm:$0xff]
        %v434 = vld [vmem:[#allocation2 + $0x2d8] sm:$0xff]
        %v435 = vld [vmem:[#allocation2 + $0x2e0] sm:$0xff]
        %v436 = vld [vmem:[#allocation2 + $0x2e8] sm:$0xff]
        %v437 = vld [vmem:[#allocation2 + $0x2f0] sm:$0xff]
        %v438 = vld [vmem:[#allocation2 + $0x2f8] sm:$0xff]
        %v439 = vld [vmem:[#allocation2 + $0x300] sm:$0xff]
        %v440 = vld [vmem:[#allocation2 + $0x308] sm:$0xff]
        %v441 = vld [vmem:[#allocation2 + $0x310] sm:$0xff]
        %v442 = vld [vmem:[#allocation2 + $0x318] sm:$0xff]
        %v443 = vld [vmem:[#allocation2 + $0x320] sm:$0xff]
        %v444 = vld [vmem:[#allocation2 + $0x328] sm:$0xff]
        %v445 = vld [vmem:[#allocation2 + $0x330] sm:$0xff]
        %v446 = vld [vmem:[#allocation2 + $0x338] sm:$0xff]
        %v447 = vld [vmem:[#allocation2 + $0x340] sm:$0xff]
        %v448 = vld [vmem:[#allocation2 + $0x348] sm:$0xff]
        %v449 = vld [vmem:[#allocation2 + $0x350] sm:$0xff]
        %v450 = vld [vmem:[#allocation2 + $0x358] sm:$0xff]
        %v451 = vld [vmem:[#allocation2 + $0x360] sm:$0xff]
        %v452 = vld [vmem:[#allocation2 + $0x368] sm:$0xff]
        %v453 = vld [vmem:[#allocation2 + $0x370] sm:$0xff]
        %v454 = vld [vmem:[#allocation2 + $0x378] sm:$0xff]
        %v455 = vld [vmem:[#allocation2 + $0x380] sm:$0xff]
        %v456 = vld [vmem:[#allocation2 + $0x388] sm:$0xff]
        %v457 = vld [vmem:[#allocation2 + $0x390] sm:$0xff]
        %v458 = vld [vmem:[#allocation2 + $0x398] sm:$0xff]
        %v459 = vld [vmem:[#allocation2 + $0x3a0] sm:$0xff]
        %v460 = vld [vmem:[#allocation2 + $0x3a8] sm:$0xff]
        %v461 = vld [vmem:[#allocation2 + $0x3b0] sm:$0xff]
        %v462 = vld [vmem:[#allocation2 + $0x3b8] sm:$0xff]
        %v463 = vld [vmem:[#allocation2 + $0x3c0] sm:$0xff]
        %v464 = vld [vmem:[#allocation2 + $0x3c8] sm:$0xff]
        %v465 = vld [vmem:[#allocation2 + $0x3d0] sm:$0xff]
        %v466 = vld [vmem:[#allocation2 + $0x3d8] sm:$0xff]
        %v467 = vld [vmem:[#allocation2 + $0x3e0] sm:$0xff]
        %v468 = vld [vmem:[#allocation2 + $0x3e8] sm:$0xff]
        %v469 = vld [vmem:[#allocation2 + $0x3f0] sm:$0xff]
        %v470 = vld [vmem:[#allocation2 + $0x3f8] sm:$0xff]
        %v471 = vld [vmem:[#allocation2 + $0x400] sm:$0xff]
        %v472 = vld [vmem:[#allocation2 + $0x408] sm:$0xff]
        %v473 = vld [vmem:[#allocation2 + $0x410] sm:$0xff]
        %v474 = vld [vmem:[#allocation2 + $0x418] sm:$0xff]
        %v475 = vld [vmem:[#allocation2 + $0x420] sm:$0xff]
        %v476 = vld [vmem:[#allocation2 + $0x428] sm:$0xff]
        %v477 = vld [vmem:[#allocation2 + $0x430] sm:$0xff]
        %v478 = vld [vmem:[#allocation2 + $0x438] sm:$0xff]
        %v479 = vld [vmem:[#allocation2 + $0x440] sm:$0xff]
        %v480 = vld [vmem:[#allocation2 + $0x448] sm:$0xff]
        %v481 = vld [vmem:[#allocation2 + $0x450] sm:$0xff]
        %v482 = vld [vmem:[#allocation2 + $0x458] sm:$0xff]
        %v483 = vld [vmem:[#allocation2 + $0x460] sm:$0xff]
        %v484 = vld [vmem:[#allocation2 + $0x468] sm:$0xff]
        %v485 = vld [vmem:[#allocation2 + $0x470] sm:$0xff]
        %v486 = vld [vmem:[#allocation2 + $0x478] sm:$0xff]
        %v487 = vld [vmem:[#allocation2 + $0x480] sm:$0xff]
        %v488 = vld [vmem:[#allocation2 + $0x488] sm:$0xff]
        %v489 = vld [vmem:[#allocation2 + $0x490] sm:$0xff]
        %v490 = vld [vmem:[#allocation2 + $0x498] sm:$0xff]
        %v491 = vld [vmem:[#allocation2 + $0x4a0] sm:$0xff]
        %v492 = vld [vmem:[#allocation2 + $0x4a8] sm:$0xff]
        %v493 = vld [vmem:[#allocation2 + $0x4b0] sm:$0xff]
        %v494 = vld [vmem:[#allocation2 + $0x4b8] sm:$0xff]
        %v495 = vld [vmem:[#allocation2 + $0x4c0] sm:$0xff]
        %v496 = vld [vmem:[#allocation2 + $0x4c8] sm:$0xff]
        %v497 = vld [vmem:[#allocation2 + $0x4d0] sm:$0xff]
        %v498 = vld [vmem:[#allocation2 + $0x4d8] sm:$0xff]
        %v499 = vld [vmem:[#allocation2 + $0x4e0] sm:$0xff]
        %v500 = vld [vmem:[#allocation2 + $0x4e8] sm:$0xff]
        %v501 = vld [vmem:[#allocation2 + $0x4f0] sm:$0xff]
        %v502 = vld [vmem:[#allocation2 + $0x4f8] sm:$0xff]
        %v503 = vld [vmem:[#allocation2 + $0x500] sm:$0xff]
        %v504 = vld [vmem:[#allocation2 + $0x508] sm:$0xff]
        %v505 = vld [vmem:[#allocation2 + $0x510] sm:$0xff]
        %v506 = vld [vmem:[#allocation2 + $0x518] sm:$0xff]
        %v507 = vld [vmem:[#allocation2 + $0x520] sm:$0xff]
        %v508 = vld [vmem:[#allocation2 + $0x528] sm:$0xff]
        %v509 = vld [vmem:[#allocation2 + $0x530] sm:$0xff]
        %v510 = vld [vmem:[#allocation2 + $0x538] sm:$0xff]
        %v511 = vld [vmem:[#allocation2 + $0x540] sm:$0xff]
        %v512 = vld [vmem:[#allocation2 + $0x548] sm:$0xff]
        %v513 = vld [vmem:[#allocation2 + $0x550] sm:$0xff]
        %v514 = vld [vmem:[#allocation2 + $0x558] sm:$0xff]
        %v515 = vld [vmem:[#allocation2 + $0x560] sm:$0xff]
        %v516 = vld [vmem:[#allocation2 + $0x568] sm:$0xff]
        %v517 = vld [vmem:[#allocation2 + $0x570] sm:$0xff]
        %v518 = vld [vmem:[#allocation2 + $0x578] sm:$0xff]
        %v519 = vld [vmem:[#allocation2 + $0x580] sm:$0xff]
        %v520 = vld [vmem:[#allocation2 + $0x588] sm:$0xff]
        %v521 = vld [vmem:[#allocation2 + $0x590] sm:$0xff]
        %v522 = vld [vmem:[#allocation2 + $0x598] sm:$0xff]
        %v523 = vld [vmem:[#allocation2 + $0x5a0] sm:$0xff]
        %v524 = vld [vmem:[#allocation2 + $0x5a8] sm:$0xff]
        %v525 = vld [vmem:[#allocation2 + $0x5b0] sm:$0xff]
        %v526 = vld [vmem:[#allocation2 + $0x5b8] sm:$0xff]
        %v527 = vld [vmem:[#allocation2 + $0x5c0] sm:$0xff]
        %v528 = vld [vmem:[#allocation2 + $0x5c8] sm:$0xff]
        %v529 = vld [vmem:[#allocation2 + $0x5d0] sm:$0xff]
        %v530 = vld [vmem:[#allocation2 + $0x5d8] sm:$0xff]
        %v531 = vld [vmem:[#allocation2 + $0x5e0] sm:$0xff]
        %v532 = vld [vmem:[#allocation2 + $0x5e8] sm:$0xff]
        %v533 = vld [vmem:[#allocation2 + $0x5f0] sm:$0xff]
        %v534 = vld [vmem:[#allocation2 + $0x5f8] sm:$0xff]
        %v535 = vld [vmem:[#allocation2 + $0x600] sm:$0xff]
        %v536 = vld [vmem:[#allocation2 + $0x608] sm:$0xff]
        %v537 = vld [vmem:[#allocation2 + $0x610] sm:$0xff]
        %v538 = vld [vmem:[#allocation2 + $0x618] sm:$0xff]
        %v539 = vld [vmem:[#allocation2 + $0x620] sm:$0xff]
        %v540 = vld [vmem:[#allocation2 + $0x628] sm:$0xff]
        %v541 = vld [vmem:[#allocation2 + $0x630] sm:$0xff]
        %v542 = vld [vmem:[#allocation2 + $0x638] sm:$0xff]
        %v543 = vld [vmem:[#allocation2 + $0x640] sm:$0xff]
        %v544 = vld [vmem:[#allocation2 + $0x648] sm:$0xff]
        %v545 = vld [vmem:[#allocation2 + $0x650] sm:$0xff]
        %v546 = vld [vmem:[#allocation2 + $0x658] sm:$0xff]
        %v547 = vld [vmem:[#allocation2 + $0x660] sm:$0xff]
        %v548 = vld [vmem:[#allocation2 + $0x668] sm:$0xff]
        %v549 = vld [vmem:[#allocation2 + $0x670] sm:$0xff]
        %v550 = vld [vmem:[#allocation2 + $0x678] sm:$0xff]
        %v551 = vld [vmem:[#allocation2 + $0x680] sm:$0xff]
        %v552 = vld [vmem:[#allocation2 + $0x688] sm:$0xff]
        %v553 = vld [vmem:[#allocation2 + $0x690] sm:$0xff]
        %v554 = vld [vmem:[#allocation2 + $0x698] sm:$0xff]
        %v555 = vld [vmem:[#allocation2 + $0x6a0] sm:$0xff]
        %v556 = vld [vmem:[#allocation2 + $0x6a8] sm:$0xff]
        %v557 = vld [vmem:[#allocation2 + $0x6b0] sm:$0xff]
        %v558 = vld [vmem:[#allocation2 + $0x6b8] sm:$0xff]
        %v559 = vld [vmem:[#allocation2 + $0x6c0] sm:$0xff]
        %v560 = vld [vmem:[#allocation2 + $0x6c8] sm:$0xff]
        %v561 = vld [vmem:[#allocation2 + $0x6d0] sm:$0xff]
        %v562 = vld [vmem:[#allocation2 + $0x6d8] sm:$0xff]
        %v563 = vld [vmem:[#allocation2 + $0x6e0] sm:$0xff]
        %v564 = vld [vmem:[#allocation2 + $0x6e8] sm:$0xff]
        %v565 = vld [vmem:[#allocation2 + $0x6f0] sm:$0xff]
        %v566 = vld [vmem:[#allocation2 + $0x6f8] sm:$0xff]
        %v567 = vld [vmem:[#allocation2 + $0x700] sm:$0xff]
        %v568 = vld [vmem:[#allocation2 + $0x708] sm:$0xff]
        %v569 = vld [vmem:[#allocation2 + $0x710] sm:$0xff]
        %v570 = vld [vmem:[#allocation2 + $0x718] sm:$0xff]
        %v571 = vld [vmem:[#allocation2 + $0x720] sm:$0xff]
        %v572 = vld [vmem:[#allocation2 + $0x728] sm:$0xff]
        %v573 = vld [vmem:[#allocation2 + $0x730] sm:$0xff]
        %v574 = vld [vmem:[#allocation2 + $0x738] sm:$0xff]
        %v575 = vld [vmem:[#allocation2 + $0x740] sm:$0xff]
        %v576 = vld [vmem:[#allocation2 + $0x748] sm:$0xff]
        %v577 = vld [vmem:[#allocation2 + $0x750] sm:$0xff]
        %v578 = vld [vmem:[#allocation2 + $0x758] sm:$0xff]
        %v579 = vld [vmem:[#allocation2 + $0x760] sm:$0xff]
        %v580 = vld [vmem:[#allocation2 + $0x768] sm:$0xff]
        %v581 = vld [vmem:[#allocation2 + $0x770] sm:$0xff]
        %v582 = vld [vmem:[#allocation2 + $0x778] sm:$0xff]
        %v583 = vld [vmem:[#allocation2 + $0x780] sm:$0xff]
        %v584 = vld [vmem:[#allocation2 + $0x788] sm:$0xff]
        %v585 = vld [vmem:[#allocation2 + $0x790] sm:$0xff]
        %v586 = vld [vmem:[#allocation2 + $0x798] sm:$0xff]
        %v587 = vld [vmem:[#allocation2 + $0x7a0] sm:$0xff]
        %v588 = vld [vmem:[#allocation2 + $0x7a8] sm:$0xff]
        %v589 = vld [vmem:[#allocation2 + $0x7b0] sm:$0xff]
        %v590 = vld [vmem:[#allocation2 + $0x7b8] sm:$0xff]
        %v591 = vld [vmem:[#allocation2 + $0x7c0] sm:$0xff]
        %v592 = vld [vmem:[#allocation2 + $0x7c8] sm:$0xff]
        %v593 = vld [vmem:[#allocation2 + $0x7d0] sm:$0xff]
        %v594 = vld [vmem:[#allocation2 + $0x7d8] sm:$0xff]
        %v595 = vld [vmem:[#allocation2 + $0x7e0] sm:$0xff]
        %v596 = vld [vmem:[#allocation2 + $0x7e8] sm:$0xff]
        %v597 = vld [vmem:[#allocation2 + $0x7f0] sm:$0xff]
        %v598 = vld [vmem:[#allocation2 + $0x7f8] sm:$0xff]
        %v599 = vld [vmem:[%s2] sm:$0xf]
        %v601 = vcombine.high %v342, %v342
        %v603 = vunpack.c.l.s4 1966171168
        %v604 = vunpack.c.0.s8 %v603
        %v605 = vlaneseq
        %v606 = vshrl.u32 %v605, 7
        %v607 = vsub.s32 %v604, %v606
        %v608 = vrot.slane %v342, %v607
        %v610 = vunpack.c.l.s4 1966171168
        %v611 = vunpack.c.0.s8 %v610
        %v612 = vlaneseq
        %v613 = vshrl.u32 %v612, 7
        %v614 = vsub.s32 %v611, %v613
        %v615 = vrot.slane %v601, %v614
        %v616 = vcombine.high %v608, %v608
        %v617 = vcombine.high %v615, %v615
        %v619 = vunpack.c.l.s4 1966171168
        %v620 = vunpack.c.0.s8 %v619
        %v621 = vlaneseq
        %v622 = vshrl.u32 %v621, 7
        %v623 = vsub.s32 %v620, %v622
        %v624 = vrot.slane %v608, %v623
        %v626 = vunpack.c.l.s4 1966171168
        %v627 = vunpack.c.0.s8 %v626
        %v628 = vlaneseq
        %v629 = vshrl.u32 %v628, 7
        %v630 = vsub.s32 %v627, %v629
        %v631 = vrot.slane %v615, %v630
        %v633 = vunpack.c.l.s4 1966171168
        %v634 = vunpack.c.0.s8 %v633
        %v635 = vlaneseq
        %v636 = vshrl.u32 %v635, 7
        %v637 = vsub.s32 %v634, %v636
        %v638 = vrot.slane %v616, %v637
        %v640 = vunpack.c.l.s4 1966171168
        %v641 = vunpack.c.0.s8 %v640
        %v642 = vlaneseq
        %v643 = vshrl.u32 %v642, 7
        %v644 = vsub.s32 %v641, %v643
        %v645 = vrot.slane %v617, %v644
        %v646 = vcombine.high %v624, %v624
        %v647 = vcombine.high %v631, %v631
        %v648 = vcombine.high %v638, %v638
        %v649 = vcombine.high %v645, %v645
        %v914 = vunpack.c.l.b16 %v343
        %v915 = vunpack.c.h.b16 %v343
        %v916 = vunpack.c.l.b16 %v344
        %v917 = vunpack.c.h.b16 %v344
        %v918 = vunpack.c.l.b16 %v345
        %v919 = vunpack.c.h.b16 %v345
        %v920 = vunpack.c.l.b16 %v346
        %v921 = vunpack.c.h.b16 %v346
        %v922 = vunpack.c.l.b16 %v347
        %v923 = vunpack.c.h.b16 %v347
        %v924 = vunpack.c.l.b16 %v348
        %v925 = vunpack.c.h.b16 %v348
        %v926 = vunpack.c.l.b16 %v349
        %v927 = vunpack.c.h.b16 %v349
        %v928 = vunpack.c.l.b16 %v350
        %v929 = vunpack.c.h.b16 %v350
        %v930 = vunpack.c.l.b16 %v351
        %v931 = vunpack.c.h.b16 %v351
        %v932 = vunpack.c.l.b16 %v352
        %v933 = vunpack.c.h.b16 %v352
        %v934 = vunpack.c.l.b16 %v353
        %v935 = vunpack.c.h.b16 %v353
        %v936 = vunpack.c.l.b16 %v354
        %v937 = vunpack.c.h.b16 %v354
        %v938 = vunpack.c.l.b16 %v355
        %v939 = vunpack.c.h.b16 %v355
        %v940 = vunpack.c.l.b16 %v356
        %v941 = vunpack.c.h.b16 %v356
        %v942 = vunpack.c.l.b16 %v357
        %v943 = vunpack.c.h.b16 %v357
        %v944 = vunpack.c.l.b16 %v358
        %v945 = vunpack.c.h.b16 %v358
        %v946 = vunpack.c.l.b16 %v359
        %v947 = vunpack.c.h.b16 %v359
        %v948 = vunpack.c.l.b16 %v360
        %v949 = vunpack.c.h.b16 %v360
        %v950 = vunpack.c.l.b16 %v361
        %v951 = vunpack.c.h.b16 %v361
        %v952 = vunpack.c.l.b16 %v362
        %v953 = vunpack.c.h.b16 %v362
        %v954 = vunpack.c.l.b16 %v363
        %v955 = vunpack.c.h.b16 %v363
        %v956 = vunpack.c.l.b16 %v364
        %v957 = vunpack.c.h.b16 %v364
        %v958 = vunpack.c.l.b16 %v365
        %v959 = vunpack.c.h.b16 %v365
        %v960 = vunpack.c.l.b16 %v366
        %v961 = vunpack.c.h.b16 %v366
        %v962 = vunpack.c.l.b16 %v367
        %v963 = vunpack.c.h.b16 %v367
        %v964 = vunpack.c.l.b16 %v368
        %v965 = vunpack.c.h.b16 %v368
        %v966 = vunpack.c.l.b16 %v369
        %v967 = vunpack.c.h.b16 %v369
        %v968 = vunpack.c.l.b16 %v370
        %v969 = vunpack.c.h.b16 %v370
        %v970 = vunpack.c.l.b16 %v371
        %v971 = vunpack.c.h.b16 %v371
        %v972 = vunpack.c.l.b16 %v372
        %v973 = vunpack.c.h.b16 %v372
        %v974 = vunpack.c.l.b16 %v373
        %v975 = vunpack.c.h.b16 %v373
        %v976 = vunpack.c.l.b16 %v374
        %v977 = vunpack.c.h.b16 %v374
        %v978 = vunpack.c.l.b16 %v375
        %v979 = vunpack.c.h.b16 %v375
        %v980 = vunpack.c.l.b16 %v376
        %v981 = vunpack.c.h.b16 %v376
        %v982 = vunpack.c.l.b16 %v377
        %v983 = vunpack.c.h.b16 %v377
        %v984 = vunpack.c.l.b16 %v378
        %v985 = vunpack.c.h.b16 %v378
        %v986 = vunpack.c.l.b16 %v379
        %v987 = vunpack.c.h.b16 %v379
        %v988 = vunpack.c.l.b16 %v380
        %v989 = vunpack.c.h.b16 %v380
        %v990 = vunpack.c.l.b16 %v381
        %v991 = vunpack.c.h.b16 %v381
        %v992 = vunpack.c.l.b16 %v382
        %v993 = vunpack.c.h.b16 %v382
        %v994 = vunpack.c.l.b16 %v383
        %v995 = vunpack.c.h.b16 %v383
        %v996 = vunpack.c.l.b16 %v384
        %v997 = vunpack.c.h.b16 %v384
        %v998 = vunpack.c.l.b16 %v385
        %v999 = vunpack.c.h.b16 %v385
        %v1000 = vunpack.c.l.b16 %v386
        %v1001 = vunpack.c.h.b16 %v386
        %v1002 = vunpack.c.l.b16 %v387
        %v1003 = vunpack.c.h.b16 %v387
        %v1004 = vunpack.c.l.b16 %v388
        %v1005 = vunpack.c.h.b16 %v388
        %v1006 = vunpack.c.l.b16 %v389
        %v1007 = vunpack.c.h.b16 %v389
        %v1008 = vunpack.c.l.b16 %v390
        %v1009 = vunpack.c.h.b16 %v390
        %v1010 = vunpack.c.l.b16 %v391
        %v1011 = vunpack.c.h.b16 %v391
        %v1012 = vunpack.c.l.b16 %v392
        %v1013 = vunpack.c.h.b16 %v392
        %v1014 = vunpack.c.l.b16 %v393
        %v1015 = vunpack.c.h.b16 %v393
        %v1016 = vunpack.c.l.b16 %v394
        %v1017 = vunpack.c.h.b16 %v394
        %v1018 = vunpack.c.l.b16 %v395
        %v1019 = vunpack.c.h.b16 %v395
        %v1020 = vunpack.c.l.b16 %v396
        %v1021 = vunpack.c.h.b16 %v396
        %v1022 = vunpack.c.l.b16 %v397
        %v1023 = vunpack.c.h.b16 %v397
        %v1024 = vunpack.c.l.b16 %v398
        %v1025 = vunpack.c.h.b16 %v398
        %v1026 = vunpack.c.l.b16 %v399
        %v1027 = vunpack.c.h.b16 %v399
        %v1028 = vunpack.c.l.b16 %v400
        %v1029 = vunpack.c.h.b16 %v400
        %v1030 = vunpack.c.l.b16 %v401
        %v1031 = vunpack.c.h.b16 %v401
        %v1032 = vunpack.c.l.b16 %v402
        %v1033 = vunpack.c.h.b16 %v402
        %v1034 = vunpack.c.l.b16 %v403
        %v1035 = vunpack.c.h.b16 %v403
        %v1036 = vunpack.c.l.b16 %v404
        %v1037 = vunpack.c.h.b16 %v404
        %v1038 = vunpack.c.l.b16 %v405
        %v1039 = vunpack.c.h.b16 %v405
        %v1040 = vunpack.c.l.b16 %v406
        %v1041 = vunpack.c.h.b16 %v406
        %v1042 = vunpack.c.l.b16 %v407
        %v1043 = vunpack.c.h.b16 %v407
        %v1044 = vunpack.c.l.b16 %v408
        %v1045 = vunpack.c.h.b16 %v408
        %v1046 = vunpack.c.l.b16 %v409
        %v1047 = vunpack.c.h.b16 %v409
        %v1048 = vunpack.c.l.b16 %v410
        %v1049 = vunpack.c.h.b16 %v410
        %v1050 = vunpack.c.l.b16 %v411
        %v1051 = vunpack.c.h.b16 %v411
        %v1052 = vunpack.c.l.b16 %v412
        %v1053 = vunpack.c.h.b16 %v412
        %v1054 = vunpack.c.l.b16 %v413
        %v1055 = vunpack.c.h.b16 %v413
        %v1056 = vunpack.c.l.b16 %v414
        %v1057 = vunpack.c.h.b16 %v414
        %v1058 = vunpack.c.l.b16 %v415
        %v1059 = vunpack.c.h.b16 %v415
        %v1060 = vunpack.c.l.b16 %v416
        %v1061 = vunpack.c.h.b16 %v416
        %v1062 = vunpack.c.l.b16 %v417
        %v1063 = vunpack.c.h.b16 %v417
        %v1064 = vunpack.c.l.b16 %v418
        %v1065 = vunpack.c.h.b16 %v418
        %v1066 = vunpack.c.l.b16 %v419
        %v1067 = vunpack.c.h.b16 %v419
        %v1068 = vunpack.c.l.b16 %v420
        %v1069 = vunpack.c.h.b16 %v420
        %v1070 = vunpack.c.l.b16 %v421
        %v1071 = vunpack.c.h.b16 %v421
        %v1072 = vunpack.c.l.b16 %v422
        %v1073 = vunpack.c.h.b16 %v422
        %v1074 = vunpack.c.l.b16 %v423
        %v1075 = vunpack.c.h.b16 %v423
        %v1076 = vunpack.c.l.b16 %v424
        %v1077 = vunpack.c.h.b16 %v424
        %v1078 = vunpack.c.l.b16 %v425
        %v1079 = vunpack.c.h.b16 %v425
        %v1080 = vunpack.c.l.b16 %v426
        %v1081 = vunpack.c.h.b16 %v426
        %v1082 = vunpack.c.l.b16 %v427
        %v1083 = vunpack.c.h.b16 %v427
        %v1084 = vunpack.c.l.b16 %v428
        %v1085 = vunpack.c.h.b16 %v428
        %v1086 = vunpack.c.l.b16 %v429
        %v1087 = vunpack.c.h.b16 %v429
        %v1088 = vunpack.c.l.b16 %v430
        %v1089 = vunpack.c.h.b16 %v430
        %v1090 = vunpack.c.l.b16 %v431
        %v1091 = vunpack.c.h.b16 %v431
        %v1092 = vunpack.c.l.b16 %v432
        %v1093 = vunpack.c.h.b16 %v432
        %v1094 = vunpack.c.l.b16 %v433
        %v1095 = vunpack.c.h.b16 %v433
        %v1096 = vunpack.c.l.b16 %v434
        %v1097 = vunpack.c.h.b16 %v434
        %v1098 = vunpack.c.l.b16 %v435
        %v1099 = vunpack.c.h.b16 %v435
        %v1100 = vunpack.c.l.b16 %v436
        %v1101 = vunpack.c.h.b16 %v436
        %v1102 = vunpack.c.l.b16 %v437
        %v1103 = vunpack.c.h.b16 %v437
        %v1104 = vunpack.c.l.b16 %v438
        %v1105 = vunpack.c.h.b16 %v438
        %v1106 = vunpack.c.l.b16 %v439
        %v1107 = vunpack.c.h.b16 %v439
        %v1108 = vunpack.c.l.b16 %v440
        %v1109 = vunpack.c.h.b16 %v440
        %v1110 = vunpack.c.l.b16 %v441
        %v1111 = vunpack.c.h.b16 %v441
        %v1112 = vunpack.c.l.b16 %v442
        %v1113 = vunpack.c.h.b16 %v442
        %v1114 = vunpack.c.l.b16 %v443
        %v1115 = vunpack.c.h.b16 %v443
        %v1116 = vunpack.c.l.b16 %v444
        %v1117 = vunpack.c.h.b16 %v444
        %v1118 = vunpack.c.l.b16 %v445
        %v1119 = vunpack.c.h.b16 %v445
        %v1120 = vunpack.c.l.b16 %v446
        %v1121 = vunpack.c.h.b16 %v446
        %v1122 = vunpack.c.l.b16 %v447
        %v1123 = vunpack.c.h.b16 %v447
        %v1124 = vunpack.c.l.b16 %v448
        %v1125 = vunpack.c.h.b16 %v448
        %v1126 = vunpack.c.l.b16 %v449
        %v1127 = vunpack.c.h.b16 %v449
        %v1128 = vunpack.c.l.b16 %v450
        %v1129 = vunpack.c.h.b16 %v450
        %v1130 = vunpack.c.l.b16 %v451
        %v1131 = vunpack.c.h.b16 %v451
        %v1132 = vunpack.c.l.b16 %v452
        %v1133 = vunpack.c.h.b16 %v452
        %v1134 = vunpack.c.l.b16 %v453
        %v1135 = vunpack.c.h.b16 %v453
        %v1136 = vunpack.c.l.b16 %v454
        %v1137 = vunpack.c.h.b16 %v454
        %v1138 = vunpack.c.l.b16 %v455
        %v1139 = vunpack.c.h.b16 %v455
        %v1140 = vunpack.c.l.b16 %v456
        %v1141 = vunpack.c.h.b16 %v456
        %v1142 = vunpack.c.l.b16 %v457
        %v1143 = vunpack.c.h.b16 %v457
        %v1144 = vunpack.c.l.b16 %v458
        %v1145 = vunpack.c.h.b16 %v458
        %v1146 = vunpack.c.l.b16 %v459
        %v1147 = vunpack.c.h.b16 %v459
        %v1148 = vunpack.c.l.b16 %v460
        %v1149 = vunpack.c.h.b16 %v460
        %v1150 = vunpack.c.l.b16 %v461
        %v1151 = vunpack.c.h.b16 %v461
        %v1152 = vunpack.c.l.b16 %v462
        %v1153 = vunpack.c.h.b16 %v462
        %v1154 = vunpack.c.l.b16 %v463
        %v1155 = vunpack.c.h.b16 %v463
        %v1156 = vunpack.c.l.b16 %v464
        %v1157 = vunpack.c.h.b16 %v464
        %v1158 = vunpack.c.l.b16 %v465
        %v1159 = vunpack.c.h.b16 %v465
        %v1160 = vunpack.c.l.b16 %v466
        %v1161 = vunpack.c.h.b16 %v466
        %v1162 = vunpack.c.l.b16 %v467
        %v1163 = vunpack.c.h.b16 %v467
        %v1164 = vunpack.c.l.b16 %v468
        %v1165 = vunpack.c.h.b16 %v468
        %v1166 = vunpack.c.l.b16 %v469
        %v1167 = vunpack.c.h.b16 %v469
        %v1168 = vunpack.c.l.b16 %v470
        %v1169 = vunpack.c.h.b16 %v470
        %v1170 = vunpack.c.l.b16 %v471
        %v1171 = vunpack.c.h.b16 %v471
        %v1172 = vunpack.c.l.b16 %v472
        %v1173 = vunpack.c.h.b16 %v472
        %v1174 = vunpack.c.l.b16 %v473
        %v1175 = vunpack.c.h.b16 %v473
        %v1176 = vunpack.c.l.b16 %v474
        %v1177 = vunpack.c.h.b16 %v474
        %v1178 = vunpack.c.l.b16 %v475
        %v1179 = vunpack.c.h.b16 %v475
        %v1180 = vunpack.c.l.b16 %v476
        %v1181 = vunpack.c.h.b16 %v476
        %v1182 = vunpack.c.l.b16 %v477
        %v1183 = vunpack.c.h.b16 %v477
        %v1184 = vunpack.c.l.b16 %v478
        %v1185 = vunpack.c.h.b16 %v478
        %v1186 = vunpack.c.l.b16 %v479
        %v1187 = vunpack.c.h.b16 %v479
        %v1188 = vunpack.c.l.b16 %v480
        %v1189 = vunpack.c.h.b16 %v480
        %v1190 = vunpack.c.l.b16 %v481
        %v1191 = vunpack.c.h.b16 %v481
        %v1192 = vunpack.c.l.b16 %v482
        %v1193 = vunpack.c.h.b16 %v482
        %v1194 = vunpack.c.l.b16 %v483
        %v1195 = vunpack.c.h.b16 %v483
        %v1196 = vunpack.c.l.b16 %v484
        %v1197 = vunpack.c.h.b16 %v484
        %v1198 = vunpack.c.l.b16 %v485
        %v1199 = vunpack.c.h.b16 %v485
        %v1200 = vunpack.c.l.b16 %v486
        %v1201 = vunpack.c.h.b16 %v486
        %v1202 = vunpack.c.l.b16 %v487
        %v1203 = vunpack.c.h.b16 %v487
        %v1204 = vunpack.c.l.b16 %v488
        %v1205 = vunpack.c.h.b16 %v488
        %v1206 = vunpack.c.l.b16 %v489
        %v1207 = vunpack.c.h.b16 %v489
        %v1208 = vunpack.c.l.b16 %v490
        %v1209 = vunpack.c.h.b16 %v490
        %v1210 = vunpack.c.l.b16 %v491
        %v1211 = vunpack.c.h.b16 %v491
        %v1212 = vunpack.c.l.b16 %v492
        %v1213 = vunpack.c.h.b16 %v492
        %v1214 = vunpack.c.l.b16 %v493
        %v1215 = vunpack.c.h.b16 %v493
        %v1216 = vunpack.c.l.b16 %v494
        %v1217 = vunpack.c.h.b16 %v494
        %v1218 = vunpack.c.l.b16 %v495
        %v1219 = vunpack.c.h.b16 %v495
        %v1220 = vunpack.c.l.b16 %v496
        %v1221 = vunpack.c.h.b16 %v496
        %v1222 = vunpack.c.l.b16 %v497
        %v1223 = vunpack.c.h.b16 %v497
        %v1224 = vunpack.c.l.b16 %v498
        %v1225 = vunpack.c.h.b16 %v498
        %v1226 = vunpack.c.l.b16 %v499
        %v1227 = vunpack.c.h.b16 %v499
        %v1228 = vunpack.c.l.b16 %v500
        %v1229 = vunpack.c.h.b16 %v500
        %v1230 = vunpack.c.l.b16 %v501
        %v1231 = vunpack.c.h.b16 %v501
        %v1232 = vunpack.c.l.b16 %v502
        %v1233 = vunpack.c.h.b16 %v502
        %v1234 = vunpack.c.l.b16 %v503
        %v1235 = vunpack.c.h.b16 %v503
        %v1236 = vunpack.c.l.b16 %v504
        %v1237 = vunpack.c.h.b16 %v504
        %v1238 = vunpack.c.l.b16 %v505
        %v1239 = vunpack.c.h.b16 %v505
        %v1240 = vunpack.c.l.b16 %v506
        %v1241 = vunpack.c.h.b16 %v506
        %v1242 = vunpack.c.l.b16 %v507
        %v1243 = vunpack.c.h.b16 %v507
        %v1244 = vunpack.c.l.b16 %v508
        %v1245 = vunpack.c.h.b16 %v508
        %v1246 = vunpack.c.l.b16 %v509
        %v1247 = vunpack.c.h.b16 %v509
        %v1248 = vunpack.c.l.b16 %v510
        %v1249 = vunpack.c.h.b16 %v510
        %v1250 = vunpack.c.l.b16 %v511
        %v1251 = vunpack.c.h.b16 %v511
        %v1252 = vunpack.c.l.b16 %v512
        %v1253 = vunpack.c.h.b16 %v512
        %v1254 = vunpack.c.l.b16 %v513
        %v1255 = vunpack.c.h.b16 %v513
        %v1256 = vunpack.c.l.b16 %v514
        %v1257 = vunpack.c.h.b16 %v514
        %v1258 = vunpack.c.l.b16 %v515
        %v1259 = vunpack.c.h.b16 %v515
        %v1260 = vunpack.c.l.b16 %v516
        %v1261 = vunpack.c.h.b16 %v516
        %v1262 = vunpack.c.l.b16 %v517
        %v1263 = vunpack.c.h.b16 %v517
        %v1264 = vunpack.c.l.b16 %v518
        %v1265 = vunpack.c.h.b16 %v518
        %v1266 = vunpack.c.l.b16 %v519
        %v1267 = vunpack.c.h.b16 %v519
        %v1268 = vunpack.c.l.b16 %v520
        %v1269 = vunpack.c.h.b16 %v520
        %v1270 = vunpack.c.l.b16 %v521
        %v1271 = vunpack.c.h.b16 %v521
        %v1272 = vunpack.c.l.b16 %v522
        %v1273 = vunpack.c.h.b16 %v522
        %v1274 = vunpack.c.l.b16 %v523
        %v1275 = vunpack.c.h.b16 %v523
        %v1276 = vunpack.c.l.b16 %v524
        %v1277 = vunpack.c.h.b16 %v524
        %v1278 = vunpack.c.l.b16 %v525
        %v1279 = vunpack.c.h.b16 %v525
        %v1280 = vunpack.c.l.b16 %v526
        %v1281 = vunpack.c.h.b16 %v526
        %v1282 = vunpack.c.l.b16 %v527
        %v1283 = vunpack.c.h.b16 %v527
        %v1284 = vunpack.c.l.b16 %v528
        %v1285 = vunpack.c.h.b16 %v528
        %v1286 = vunpack.c.l.b16 %v529
        %v1287 = vunpack.c.h.b16 %v529
        %v1288 = vunpack.c.l.b16 %v530
        %v1289 = vunpack.c.h.b16 %v530
        %v1290 = vunpack.c.l.b16 %v531
        %v1291 = vunpack.c.h.b16 %v531
        %v1292 = vunpack.c.l.b16 %v532
        %v1293 = vunpack.c.h.b16 %v532
        %v1294 = vunpack.c.l.b16 %v533
        %v1295 = vunpack.c.h.b16 %v533
        %v1296 = vunpack.c.l.b16 %v534
        %v1297 = vunpack.c.h.b16 %v534
        %v1298 = vunpack.c.l.b16 %v535
        %v1299 = vunpack.c.h.b16 %v535
        %v1300 = vunpack.c.l.b16 %v536
        %v1301 = vunpack.c.h.b16 %v536
        %v1302 = vunpack.c.l.b16 %v537
        %v1303 = vunpack.c.h.b16 %v537
        %v1304 = vunpack.c.l.b16 %v538
        %v1305 = vunpack.c.h.b16 %v538
        %v1306 = vunpack.c.l.b16 %v539
        %v1307 = vunpack.c.h.b16 %v539
        %v1308 = vunpack.c.l.b16 %v540
        %v1309 = vunpack.c.h.b16 %v540
        %v1310 = vunpack.c.l.b16 %v541
        %v1311 = vunpack.c.h.b16 %v541
        %v1312 = vunpack.c.l.b16 %v542
        %v1313 = vunpack.c.h.b16 %v542
        %v1314 = vunpack.c.l.b16 %v543
        %v1315 = vunpack.c.h.b16 %v543
        %v1316 = vunpack.c.l.b16 %v544
        %v1317 = vunpack.c.h.b16 %v544
        %v1318 = vunpack.c.l.b16 %v545
        %v1319 = vunpack.c.h.b16 %v545
        %v1320 = vunpack.c.l.b16 %v546
        %v1321 = vunpack.c.h.b16 %v546
        %v1322 = vunpack.c.l.b16 %v547
        %v1323 = vunpack.c.h.b16 %v547
        %v1324 = vunpack.c.l.b16 %v548
        %v1325 = vunpack.c.h.b16 %v548
        %v1326 = vunpack.c.l.b16 %v549
        %v1327 = vunpack.c.h.b16 %v549
        %v1328 = vunpack.c.l.b16 %v550
        %v1329 = vunpack.c.h.b16 %v550
        %v1330 = vunpack.c.l.b16 %v551
        %v1331 = vunpack.c.h.b16 %v551
        %v1332 = vunpack.c.l.b16 %v552
        %v1333 = vunpack.c.h.b16 %v552
        %v1334 = vunpack.c.l.b16 %v553
        %v1335 = vunpack.c.h.b16 %v553
        %v1336 = vunpack.c.l.b16 %v554
        %v1337 = vunpack.c.h.b16 %v554
        %v1338 = vunpack.c.l.b16 %v555
        %v1339 = vunpack.c.h.b16 %v555
        %v1340 = vunpack.c.l.b16 %v556
        %v1341 = vunpack.c.h.b16 %v556
        %v1342 = vunpack.c.l.b16 %v557
        %v1343 = vunpack.c.h.b16 %v557
        %v1344 = vunpack.c.l.b16 %v558
        %v1345 = vunpack.c.h.b16 %v558
        %v1346 = vunpack.c.l.b16 %v559
        %v1347 = vunpack.c.h.b16 %v559
        %v1348 = vunpack.c.l.b16 %v560
        %v1349 = vunpack.c.h.b16 %v560
        %v1350 = vunpack.c.l.b16 %v561
        %v1351 = vunpack.c.h.b16 %v561
        %v1352 = vunpack.c.l.b16 %v562
        %v1353 = vunpack.c.h.b16 %v562
        %v1354 = vunpack.c.l.b16 %v563
        %v1355 = vunpack.c.h.b16 %v563
        %v1356 = vunpack.c.l.b16 %v564
        %v1357 = vunpack.c.h.b16 %v564
        %v1358 = vunpack.c.l.b16 %v565
        %v1359 = vunpack.c.h.b16 %v565
        %v1360 = vunpack.c.l.b16 %v566
        %v1361 = vunpack.c.h.b16 %v566
        %v1362 = vunpack.c.l.b16 %v567
        %v1363 = vunpack.c.h.b16 %v567
        %v1364 = vunpack.c.l.b16 %v568
        %v1365 = vunpack.c.h.b16 %v568
        %v1366 = vunpack.c.l.b16 %v569
        %v1367 = vunpack.c.h.b16 %v569
        %v1368 = vunpack.c.l.b16 %v570
        %v1369 = vunpack.c.h.b16 %v570
        %v1370 = vunpack.c.l.b16 %v571
        %v1371 = vunpack.c.h.b16 %v571
        %v1372 = vunpack.c.l.b16 %v572
        %v1373 = vunpack.c.h.b16 %v572
        %v1374 = vunpack.c.l.b16 %v573
        %v1375 = vunpack.c.h.b16 %v573
        %v1376 = vunpack.c.l.b16 %v574
        %v1377 = vunpack.c.h.b16 %v574
        %v1378 = vunpack.c.l.b16 %v575
        %v1379 = vunpack.c.h.b16 %v575
        %v1380 = vunpack.c.l.b16 %v576
        %v1381 = vunpack.c.h.b16 %v576
        %v1382 = vunpack.c.l.b16 %v577
        %v1383 = vunpack.c.h.b16 %v577
        %v1384 = vunpack.c.l.b16 %v578
        %v1385 = vunpack.c.h.b16 %v578
        %v1386 = vunpack.c.l.b16 %v579
        %v1387 = vunpack.c.h.b16 %v579
        %v1388 = vunpack.c.l.b16 %v580
        %v1389 = vunpack.c.h.b16 %v580
        %v1390 = vunpack.c.l.b16 %v581
        %v1391 = vunpack.c.h.b16 %v581
        %v1392 = vunpack.c.l.b16 %v582
        %v1393 = vunpack.c.h.b16 %v582
        %v1394 = vunpack.c.l.b16 %v583
        %v1395 = vunpack.c.h.b16 %v583
        %v1396 = vunpack.c.l.b16 %v584
        %v1397 = vunpack.c.h.b16 %v584
        %v1398 = vunpack.c.l.b16 %v585
        %v1399 = vunpack.c.h.b16 %v585
        %v1400 = vunpack.c.l.b16 %v586
        %v1401 = vunpack.c.h.b16 %v586
        %v1402 = vunpack.c.l.b16 %v587
        %v1403 = vunpack.c.h.b16 %v587
        %v1404 = vunpack.c.l.b16 %v588
        %v1405 = vunpack.c.h.b16 %v588
        %v1406 = vunpack.c.l.b16 %v589
        %v1407 = vunpack.c.h.b16 %v589
        %v1408 = vunpack.c.l.b16 %v590
        %v1409 = vunpack.c.h.b16 %v590
        %v1410 = vunpack.c.l.b16 %v591
        %v1411 = vunpack.c.h.b16 %v591
        %v1412 = vunpack.c.l.b16 %v592
        %v1413 = vunpack.c.h.b16 %v592
        %v1414 = vunpack.c.l.b16 %v593
        %v1415 = vunpack.c.h.b16 %v593
        %v1416 = vunpack.c.l.b16 %v594
        %v1417 = vunpack.c.h.b16 %v594
        %v1418 = vunpack.c.l.b16 %v595
        %v1419 = vunpack.c.h.b16 %v595
        %v1420 = vunpack.c.l.b16 %v596
        %v1421 = vunpack.c.h.b16 %v596
        %v1422 = vunpack.c.l.b16 %v597
        %v1423 = vunpack.c.h.b16 %v597
        %v1424 = vunpack.c.l.b16 %v598
        %v1425 = vunpack.c.h.b16 %v598
        %v1426 = vpack.c.b16 %v918, %v914
        %v1427 = vpack.c.b16 %v919, %v915
        %v1428 = vpack.c.b16 %v920, %v916
        %v1429 = vpack.c.b16 %v921, %v917
        %v1430 = vpack.c.b16 %v926, %v922
        %v1431 = vpack.c.b16 %v927, %v923
        %v1432 = vpack.c.b16 %v928, %v924
        %v1433 = vpack.c.b16 %v929, %v925
        %v1434 = vpack.c.b16 %v934, %v930
        %v1435 = vpack.c.b16 %v935, %v931
        %v1436 = vpack.c.b16 %v936, %v932
        %v1437 = vpack.c.b16 %v937, %v933
        %v1438 = vpack.c.b16 %v942, %v938
        %v1439 = vpack.c.b16 %v943, %v939
        %v1440 = vpack.c.b16 %v944, %v940
        %v1441 = vpack.c.b16 %v945, %v941
        %v1442 = vpack.c.b16 %v950, %v946
        %v1443 = vpack.c.b16 %v951, %v947
        %v1444 = vpack.c.b16 %v952, %v948
        %v1445 = vpack.c.b16 %v953, %v949
        %v1446 = vpack.c.b16 %v958, %v954
        %v1447 = vpack.c.b16 %v959, %v955
        %v1448 = vpack.c.b16 %v960, %v956
        %v1449 = vpack.c.b16 %v961, %v957
        %v1450 = vpack.c.b16 %v966, %v962
        %v1451 = vpack.c.b16 %v967, %v963
        %v1452 = vpack.c.b16 %v968, %v964
        %v1453 = vpack.c.b16 %v969, %v965
        %v1454 = vpack.c.b16 %v974, %v970
        %v1455 = vpack.c.b16 %v975, %v971
        %v1456 = vpack.c.b16 %v976, %v972
        %v1457 = vpack.c.b16 %v977, %v973
        %v1458 = vpack.c.b16 %v982, %v978
        %v1459 = vpack.c.b16 %v983, %v979
        %v1460 = vpack.c.b16 %v984, %v980
        %v1461 = vpack.c.b16 %v985, %v981
        %v1462 = vpack.c.b16 %v990, %v986
        %v1463 = vpack.c.b16 %v991, %v987
        %v1464 = vpack.c.b16 %v992, %v988
        %v1465 = vpack.c.b16 %v993, %v989
        %v1466 = vpack.c.b16 %v998, %v994
        %v1467 = vpack.c.b16 %v999, %v995
        %v1468 = vpack.c.b16 %v1000, %v996
        %v1469 = vpack.c.b16 %v1001, %v997
        %v1470 = vpack.c.b16 %v1006, %v1002
        %v1471 = vpack.c.b16 %v1007, %v1003
        %v1472 = vpack.c.b16 %v1008, %v1004
        %v1473 = vpack.c.b16 %v1009, %v1005
        %v1474 = vpack.c.b16 %v1014, %v1010
        %v1475 = vpack.c.b16 %v1015, %v1011
        %v1476 = vpack.c.b16 %v1016, %v1012
        %v1477 = vpack.c.b16 %v1017, %v1013
        %v1478 = vpack.c.b16 %v1022, %v1018
        %v1479 = vpack.c.b16 %v1023, %v1019
        %v1480 = vpack.c.b16 %v1024, %v1020
        %v1481 = vpack.c.b16 %v1025, %v1021
        %v1482 = vpack.c.b16 %v1030, %v1026
        %v1483 = vpack.c.b16 %v1031, %v1027
        %v1484 = vpack.c.b16 %v1032, %v1028
        %v1485 = vpack.c.b16 %v1033, %v1029
        %v1486 = vpack.c.b16 %v1038, %v1034
        %v1487 = vpack.c.b16 %v1039, %v1035
        %v1488 = vpack.c.b16 %v1040, %v1036
        %v1489 = vpack.c.b16 %v1041, %v1037
        %v1490 = vpack.c.b16 %v1046, %v1042
        %v1491 = vpack.c.b16 %v1047, %v1043
        %v1492 = vpack.c.b16 %v1048, %v1044
        %v1493 = vpack.c.b16 %v1049, %v1045
        %v1494 = vpack.c.b16 %v1054, %v1050
        %v1495 = vpack.c.b16 %v1055, %v1051
        %v1496 = vpack.c.b16 %v1056, %v1052
        %v1497 = vpack.c.b16 %v1057, %v1053
        %v1498 = vpack.c.b16 %v1062, %v1058
        %v1499 = vpack.c.b16 %v1063, %v1059
        %v1500 = vpack.c.b16 %v1064, %v1060
        %v1501 = vpack.c.b16 %v1065, %v1061
        %v1502 = vpack.c.b16 %v1070, %v1066
        %v1503 = vpack.c.b16 %v1071, %v1067
        %v1504 = vpack.c.b16 %v1072, %v1068
        %v1505 = vpack.c.b16 %v1073, %v1069
        %v1506 = vpack.c.b16 %v1078, %v1074
        %v1507 = vpack.c.b16 %v1079, %v1075
        %v1508 = vpack.c.b16 %v1080, %v1076
        %v1509 = vpack.c.b16 %v1081, %v1077
        %v1510 = vpack.c.b16 %v1086, %v1082
        %v1511 = vpack.c.b16 %v1087, %v1083
        %v1512 = vpack.c.b16 %v1088, %v1084
        %v1513 = vpack.c.b16 %v1089, %v1085
        %v1514 = vpack.c.b16 %v1094, %v1090
        %v1515 = vpack.c.b16 %v1095, %v1091
        %v1516 = vpack.c.b16 %v1096, %v1092
        %v1517 = vpack.c.b16 %v1097, %v1093
        %v1518 = vpack.c.b16 %v1102, %v1098
        %v1519 = vpack.c.b16 %v1103, %v1099
        %v1520 = vpack.c.b16 %v1104, %v1100
        %v1521 = vpack.c.b16 %v1105, %v1101
        %v1522 = vpack.c.b16 %v1110, %v1106
        %v1523 = vpack.c.b16 %v1111, %v1107
        %v1524 = vpack.c.b16 %v1112, %v1108
        %v1525 = vpack.c.b16 %v1113, %v1109
        %v1526 = vpack.c.b16 %v1118, %v1114
        %v1527 = vpack.c.b16 %v1119, %v1115
        %v1528 = vpack.c.b16 %v1120, %v1116
        %v1529 = vpack.c.b16 %v1121, %v1117
        %v1530 = vpack.c.b16 %v1126, %v1122
        %v1531 = vpack.c.b16 %v1127, %v1123
        %v1532 = vpack.c.b16 %v1128, %v1124
        %v1533 = vpack.c.b16 %v1129, %v1125
        %v1534 = vpack.c.b16 %v1134, %v1130
        %v1535 = vpack.c.b16 %v1135, %v1131
        %v1536 = vpack.c.b16 %v1136, %v1132
        %v1537 = vpack.c.b16 %v1137, %v1133
        %v1538 = vpack.c.b16 %v1142, %v1138
        %v1539 = vpack.c.b16 %v1143, %v1139
        %v1540 = vpack.c.b16 %v1144, %v1140
        %v1541 = vpack.c.b16 %v1145, %v1141
        %v1542 = vpack.c.b16 %v1150, %v1146
        %v1543 = vpack.c.b16 %v1151, %v1147
        %v1544 = vpack.c.b16 %v1152, %v1148
        %v1545 = vpack.c.b16 %v1153, %v1149
        %v1546 = vpack.c.b16 %v1158, %v1154
        %v1547 = vpack.c.b16 %v1159, %v1155
        %v1548 = vpack.c.b16 %v1160, %v1156
        %v1549 = vpack.c.b16 %v1161, %v1157
        %v1550 = vpack.c.b16 %v1166, %v1162
        %v1551 = vpack.c.b16 %v1167, %v1163
        %v1552 = vpack.c.b16 %v1168, %v1164
        %v1553 = vpack.c.b16 %v1169, %v1165
        %v1554 = vpack.c.b16 %v1174, %v1170
        %v1555 = vpack.c.b16 %v1175, %v1171
        %v1556 = vpack.c.b16 %v1176, %v1172
        %v1557 = vpack.c.b16 %v1177, %v1173
        %v1558 = vpack.c.b16 %v1182, %v1178
        %v1559 = vpack.c.b16 %v1183, %v1179
        %v1560 = vpack.c.b16 %v1184, %v1180
        %v1561 = vpack.c.b16 %v1185, %v1181
        %v1562 = vpack.c.b16 %v1190, %v1186
        %v1563 = vpack.c.b16 %v1191, %v1187
        %v1564 = vpack.c.b16 %v1192, %v1188
        %v1565 = vpack.c.b16 %v1193, %v1189
        %v1566 = vpack.c.b16 %v1198, %v1194
        %v1567 = vpack.c.b16 %v1199, %v1195
        %v1568 = vpack.c.b16 %v1200, %v1196
        %v1569 = vpack.c.b16 %v1201, %v1197
        %v1570 = vpack.c.b16 %v1206, %v1202
        %v1571 = vpack.c.b16 %v1207, %v1203
        %v1572 = vpack.c.b16 %v1208, %v1204
        %v1573 = vpack.c.b16 %v1209, %v1205
        %v1574 = vpack.c.b16 %v1214, %v1210
        %v1575 = vpack.c.b16 %v1215, %v1211
        %v1576 = vpack.c.b16 %v1216, %v1212
        %v1577 = vpack.c.b16 %v1217, %v1213
        %v1578 = vpack.c.b16 %v1222, %v1218
        %v1579 = vpack.c.b16 %v1223, %v1219
        %v1580 = vpack.c.b16 %v1224, %v1220
        %v1581 = vpack.c.b16 %v1225, %v1221
        %v1582 = vpack.c.b16 %v1230, %v1226
        %v1583 = vpack.c.b16 %v1231, %v1227
        %v1584 = vpack.c.b16 %v1232, %v1228
        %v1585 = vpack.c.b16 %v1233, %v1229
        %v1586 = vpack.c.b16 %v1238, %v1234
        %v1587 = vpack.c.b16 %v1239, %v1235
        %v1588 = vpack.c.b16 %v1240, %v1236
        %v1589 = vpack.c.b16 %v1241, %v1237
        %v1590 = vpack.c.b16 %v1246, %v1242
        %v1591 = vpack.c.b16 %v1247, %v1243
        %v1592 = vpack.c.b16 %v1248, %v1244
        %v1593 = vpack.c.b16 %v1249, %v1245
        %v1594 = vpack.c.b16 %v1254, %v1250
        %v1595 = vpack.c.b16 %v1255, %v1251
        %v1596 = vpack.c.b16 %v1256, %v1252
        %v1597 = vpack.c.b16 %v1257, %v1253
        %v1598 = vpack.c.b16 %v1262, %v1258
        %v1599 = vpack.c.b16 %v1263, %v1259
        %v1600 = vpack.c.b16 %v1264, %v1260
        %v1601 = vpack.c.b16 %v1265, %v1261
        %v1602 = vpack.c.b16 %v1270, %v1266
        %v1603 = vpack.c.b16 %v1271, %v1267
        %v1604 = vpack.c.b16 %v1272, %v1268
        %v1605 = vpack.c.b16 %v1273, %v1269
        %v1606 = vpack.c.b16 %v1278, %v1274
        %v1607 = vpack.c.b16 %v1279, %v1275
        %v1608 = vpack.c.b16 %v1280, %v1276
        %v1609 = vpack.c.b16 %v1281, %v1277
        %v1610 = vpack.c.b16 %v1286, %v1282
        %v1611 = vpack.c.b16 %v1287, %v1283
        %v1612 = vpack.c.b16 %v1288, %v1284
        %v1613 = vpack.c.b16 %v1289, %v1285
        %v1614 = vpack.c.b16 %v1294, %v1290
        %v1615 = vpack.c.b16 %v1295, %v1291
        %v1616 = vpack.c.b16 %v1296, %v1292
        %v1617 = vpack.c.b16 %v1297, %v1293
        %v1618 = vpack.c.b16 %v1302, %v1298
        %v1619 = vpack.c.b16 %v1303, %v1299
        %v1620 = vpack.c.b16 %v1304, %v1300
        %v1621 = vpack.c.b16 %v1305, %v1301
        %v1622 = vpack.c.b16 %v1310, %v1306
        %v1623 = vpack.c.b16 %v1311, %v1307
        %v1624 = vpack.c.b16 %v1312, %v1308
        %v1625 = vpack.c.b16 %v1313, %v1309
        %v1626 = vpack.c.b16 %v1318, %v1314
        %v1627 = vpack.c.b16 %v1319, %v1315
        %v1628 = vpack.c.b16 %v1320, %v1316
        %v1629 = vpack.c.b16 %v1321, %v1317
        %v1630 = vpack.c.b16 %v1326, %v1322
        %v1631 = vpack.c.b16 %v1327, %v1323
        %v1632 = vpack.c.b16 %v1328, %v1324
        %v1633 = vpack.c.b16 %v1329, %v1325
        %v1634 = vpack.c.b16 %v1334, %v1330
        %v1635 = vpack.c.b16 %v1335, %v1331
        %v1636 = vpack.c.b16 %v1336, %v1332
        %v1637 = vpack.c.b16 %v1337, %v1333
        %v1638 = vpack.c.b16 %v1342, %v1338
        %v1639 = vpack.c.b16 %v1343, %v1339
        %v1640 = vpack.c.b16 %v1344, %v1340
        %v1641 = vpack.c.b16 %v1345, %v1341
        %v1642 = vpack.c.b16 %v1350, %v1346
        %v1643 = vpack.c.b16 %v1351, %v1347
        %v1644 = vpack.c.b16 %v1352, %v1348
        %v1645 = vpack.c.b16 %v1353, %v1349
        %v1646 = vpack.c.b16 %v1358, %v1354
        %v1647 = vpack.c.b16 %v1359, %v1355
        %v1648 = vpack.c.b16 %v1360, %v1356
        %v1649 = vpack.c.b16 %v1361, %v1357
        %v1650 = vpack.c.b16 %v1366, %v1362
        %v1651 = vpack.c.b16 %v1367, %v1363
        %v1652 = vpack.c.b16 %v1368, %v1364
        %v1653 = vpack.c.b16 %v1369, %v1365
        %v1654 = vpack.c.b16 %v1374, %v1370
        %v1655 = vpack.c.b16 %v1375, %v1371
        %v1656 = vpack.c.b16 %v1376, %v1372
        %v1657 = vpack.c.b16 %v1377, %v1373
        %v1658 = vpack.c.b16 %v1382, %v1378
        %v1659 = vpack.c.b16 %v1383, %v1379
        %v1660 = vpack.c.b16 %v1384, %v1380
        %v1661 = vpack.c.b16 %v1385, %v1381
        %v1662 = vpack.c.b16 %v1390, %v1386
        %v1663 = vpack.c.b16 %v1391, %v1387
        %v1664 = vpack.c.b16 %v1392, %v1388
        %v1665 = vpack.c.b16 %v1393, %v1389
        %v1666 = vpack.c.b16 %v1398, %v1394
        %v1667 = vpack.c.b16 %v1399, %v1395
        %v1668 = vpack.c.b16 %v1400, %v1396
        %v1669 = vpack.c.b16 %v1401, %v1397
        %v1670 = vpack.c.b16 %v1406, %v1402
        %v1671 = vpack.c.b16 %v1407, %v1403
        %v1672 = vpack.c.b16 %v1408, %v1404
        %v1673 = vpack.c.b16 %v1409, %v1405
        %v1674 = vpack.c.b16 %v1414, %v1410
        %v1675 = vpack.c.b16 %v1415, %v1411
        %v1676 = vpack.c.b16 %v1416, %v1412
        %v1677 = vpack.c.b16 %v1417, %v1413
        %v1678 = vpack.c.b16 %v1422, %v1418
        %v1679 = vpack.c.b16 %v1423, %v1419
        %v1680 = vpack.c.b16 %v1424, %v1420
        %v1681 = vpack.c.b16 %v1425, %v1421
        %v1939 = vlaneseq
        %v1940 = vshrl.u32 %v1939, 7
        %v1941 = vsub.s32 0, %v1940
        %v1942 = vrot.slane %v599, %v1941
        %v1943 = vlaneseq
        %v1944 = vshrl.u32 %v1943, 7
        %v1945 = vsub.s32 1, %v1944
        %v1946 = vrot.slane %v599, %v1945
        %v1947 = vlaneseq
        %v1948 = vshrl.u32 %v1947, 7
        %v1949 = vsub.s32 2, %v1948
        %v1950 = vrot.slane %v599, %v1949
        %v1951 = vlaneseq
        %v1952 = vshrl.u32 %v1951, 7
        %v1953 = vsub.s32 3, %v1952
        %v1954 = vrot.slane %v599, %v1953
        %1959 = vmatprep.subr.bf16.mxu0 %v1427
        %1960 = vmatpush1.bf16.msra.mxu0 %v1426
        %1961 = vmatprep.subr.bf16.mxu0 %v1431
        %1962 = vmatpush1.bf16.msra.mxu0 %v1430
        %1963 = vmatprep.subr.bf16.mxu0 %v1435
        %1964 = vmatpush1.bf16.msra.mxu0 %v1434
        %1965 = vmatprep.subr.bf16.mxu0 %v1439
        %1966 = vmatpush1.bf16.msra.mxu0 %v1438
        %1967 = vmatprep.subr.bf16.mxu0 %v1443
        %1968 = vmatpush1.bf16.msra.mxu0 %v1442
        %1969 = vmatprep.subr.bf16.mxu0 %v1447
        %1970 = vmatpush1.bf16.msra.mxu0 %v1446
        %1971 = vmatprep.subr.bf16.mxu0 %v1451
        %1972 = vmatpush1.bf16.msra.mxu0 %v1450
        %1973 = vmatprep.subr.bf16.mxu0 %v1455
        %1974 = vmatpush1.bf16.msra.mxu0 %v1454
        %1975 = vmatprep.subr.bf16.mxu0 %v1459
        %1976 = vmatpush1.bf16.msra.mxu0 %v1458
        %1977 = vmatprep.subr.bf16.mxu0 %v1463
        %1978 = vmatpush1.bf16.msra.mxu0 %v1462
        %1979 = vmatprep.subr.bf16.mxu0 %v1467
        %1980 = vmatpush1.bf16.msra.mxu0 %v1466
        %1981 = vmatprep.subr.bf16.mxu0 %v1471
        %1982 = vmatpush1.bf16.msra.mxu0 %v1470
        %1983 = vmatprep.subr.bf16.mxu0 %v1475
        %1984 = vmatpush1.bf16.msra.mxu0 %v1474
        %1985 = vmatprep.subr.bf16.mxu0 %v1479
        %1986 = vmatpush1.bf16.msra.mxu0 %v1478
        %1987 = vmatprep.subr.bf16.mxu0 %v1483
        %1988 = vmatpush1.bf16.msra.mxu0 %v1482
        %1989 = vmatprep.subr.bf16.mxu0 %v1487
        %1990 = vmatpush1.bf16.msra.mxu0 %v1486
        %1991 = vmatprep.mubr.bf16.mxu0 %v638
        %1992 = vmatmul.mubr.bf16.gmra.mrb[0].mxu0 %v624
        %v1993 = vpop.f32.mrb[0].mxu0
        %v1994 = vadd.f32 %v1942, %v1993
        %v1995 = vpop.f32.mrb[0].mxu0
        %v1996 = vadd.f32 %v1946, %v1995
        %v1997 = vpop.f32.mrb[0].mxu0
        %v1998 = vpop.f32.mrb[0].mxu0
        %1999 = vdwg.mxu0
        %2000 = vmatprep.subr.bf16.mxu0 %v1491
        %2001 = vmatpush1.bf16.msra.mxu0 %v1490
        %2002 = vmatprep.subr.bf16.mxu0 %v1495
        %2003 = vmatpush1.bf16.msra.mxu0 %v1494
        %2004 = vmatprep.subr.bf16.mxu0 %v1499
        %2005 = vmatpush1.bf16.msra.mxu0 %v1498
        %2006 = vmatprep.subr.bf16.mxu0 %v1503
        %2007 = vmatpush1.bf16.msra.mxu0 %v1502
        %2008 = vmatprep.subr.bf16.mxu0 %v1507
        %2009 = vmatpush1.bf16.msra.mxu0 %v1506
        %2010 = vmatprep.subr.bf16.mxu0 %v1511
        %2011 = vmatpush1.bf16.msra.mxu0 %v1510
        %2012 = vmatprep.subr.bf16.mxu0 %v1515
        %2013 = vmatpush1.bf16.msra.mxu0 %v1514
        %2014 = vmatprep.subr.bf16.mxu0 %v1519
        %2015 = vmatpush1.bf16.msra.mxu0 %v1518
        %2016 = vmatprep.subr.bf16.mxu0 %v1523
        %2017 = vmatpush1.bf16.msra.mxu0 %v1522
        %2018 = vmatprep.subr.bf16.mxu0 %v1527
        %2019 = vmatpush1.bf16.msra.mxu0 %v1526
        %2020 = vmatprep.subr.bf16.mxu0 %v1531
        %2021 = vmatpush1.bf16.msra.mxu0 %v1530
        %2022 = vmatprep.subr.bf16.mxu0 %v1535
        %2023 = vmatpush1.bf16.msra.mxu0 %v1534
        %2024 = vmatprep.subr.bf16.mxu0 %v1539
        %2025 = vmatpush1.bf16.msra.mxu0 %v1538
        %2026 = vmatprep.subr.bf16.mxu0 %v1543
        %2027 = vmatpush1.bf16.msra.mxu0 %v1542
        %2028 = vmatprep.subr.bf16.mxu0 %v1547
        %2029 = vmatpush1.bf16.msra.mxu0 %v1546
        %2030 = vmatprep.subr.bf16.mxu0 %v1551
        %2031 = vmatpush1.bf16.msra.mxu0 %v1550
        %2032 = vmatprep.mubr.bf16.mxu0 %v648
        %2033 = vmatmul.mubr.bf16.gmra.mrb[0].mxu0 %v646
        %v2034 = vpop.f32.mrb[0].mxu0
        %v2035 = vadd.f32 %v1994, %v2034
        %v2036 = vpop.f32.mrb[0].mxu0
        %v2037 = vadd.f32 %v1996, %v2036
        %v2038 = vpop.f32.mrb[0].mxu0
        %v2039 = vpop.f32.mrb[0].mxu0
        %2040 = vdwg.mxu0
        %2041 = vmatprep.subr.bf16.mxu0 %v1555
        %2042 = vmatpush1.bf16.msra.mxu0 %v1554
        %2043 = vmatprep.subr.bf16.mxu0 %v1559
        %2044 = vmatpush1.bf16.msra.mxu0 %v1558
        %2045 = vmatprep.subr.bf16.mxu0 %v1563
        %2046 = vmatpush1.bf16.msra.mxu0 %v1562
        %2047 = vmatprep.subr.bf16.mxu0 %v1567
        %2048 = vmatpush1.bf16.msra.mxu0 %v1566
        %2049 = vmatprep.subr.bf16.mxu0 %v1571
        %2050 = vmatpush1.bf16.msra.mxu0 %v1570
        %2051 = vmatprep.subr.bf16.mxu0 %v1575
        %2052 = vmatpush1.bf16.msra.mxu0 %v1574
        %2053 = vmatprep.subr.bf16.mxu0 %v1579
        %2054 = vmatpush1.bf16.msra.mxu0 %v1578
        %2055 = vmatprep.subr.bf16.mxu0 %v1583
        %2056 = vmatpush1.bf16.msra.mxu0 %v1582
        %2057 = vmatprep.subr.bf16.mxu0 %v1587
        %2058 = vmatpush1.bf16.msra.mxu0 %v1586
        %2059 = vmatprep.subr.bf16.mxu0 %v1591
        %2060 = vmatpush1.bf16.msra.mxu0 %v1590
        %2061 = vmatprep.subr.bf16.mxu0 %v1595
        %2062 = vmatpush1.bf16.msra.mxu0 %v1594
        %2063 = vmatprep.subr.bf16.mxu0 %v1599
        %2064 = vmatpush1.bf16.msra.mxu0 %v1598
        %2065 = vmatprep.subr.bf16.mxu0 %v1603
        %2066 = vmatpush1.bf16.msra.mxu0 %v1602
        %2067 = vmatprep.subr.bf16.mxu0 %v1607
        %2068 = vmatpush1.bf16.msra.mxu0 %v1606
        %2069 = vmatprep.subr.bf16.mxu0 %v1611
        %2070 = vmatpush1.bf16.msra.mxu0 %v1610
        %2071 = vmatprep.subr.bf16.mxu0 %v1615
        %2072 = vmatpush1.bf16.msra.mxu0 %v1614
        %2073 = vmatprep.mubr.bf16.mxu0 %v645
        %2074 = vmatmul.mubr.bf16.gmra.mrb[0].mxu0 %v631
        %v2075 = vpop.f32.mrb[0].mxu0
        %v2076 = vadd.f32 %v2035, %v2075
        %v2077 = vpop.f32.mrb[0].mxu0
        %v2078 = vadd.f32 %v2037, %v2077
        %v2079 = vpop.f32.mrb[0].mxu0
        %v2080 = vpop.f32.mrb[0].mxu0
        %2081 = vdwg.mxu0
        %2082 = vmatprep.subr.bf16.mxu0 %v1619
        %2083 = vmatpush1.bf16.msra.mxu0 %v1618
        %2084 = vmatprep.subr.bf16.mxu0 %v1623
        %2085 = vmatpush1.bf16.msra.mxu0 %v1622
        %2086 = vmatprep.subr.bf16.mxu0 %v1627
        %2087 = vmatpush1.bf16.msra.mxu0 %v1626
        %2088 = vmatprep.subr.bf16.mxu0 %v1631
        %2089 = vmatpush1.bf16.msra.mxu0 %v1630
        %2090 = vmatprep.subr.bf16.mxu0 %v1635
        %2091 = vmatpush1.bf16.msra.mxu0 %v1634
        %2092 = vmatprep.subr.bf16.mxu0 %v1639
        %2093 = vmatpush1.bf16.msra.mxu0 %v1638
        %2094 = vmatprep.subr.bf16.mxu0 %v1643
        %2095 = vmatpush1.bf16.msra.mxu0 %v1642
        %2096 = vmatprep.subr.bf16.mxu0 %v1647
        %2097 = vmatpush1.bf16.msra.mxu0 %v1646
        %2098 = vmatprep.subr.bf16.mxu0 %v1651
        %2099 = vmatpush1.bf16.msra.mxu0 %v1650
        %2100 = vmatprep.subr.bf16.mxu0 %v1655
        %2101 = vmatpush1.bf16.msra.mxu0 %v1654
        %2102 = vmatprep.subr.bf16.mxu0 %v1659
        %2103 = vmatpush1.bf16.msra.mxu0 %v1658
        %2104 = vmatprep.subr.bf16.mxu0 %v1663
        %2105 = vmatpush1.bf16.msra.mxu0 %v1662
        %2106 = vmatprep.subr.bf16.mxu0 %v1667
        %2107 = vmatpush1.bf16.msra.mxu0 %v1666
        %2108 = vmatprep.subr.bf16.mxu0 %v1671
        %2109 = vmatpush1.bf16.msra.mxu0 %v1670
        %2110 = vmatprep.subr.bf16.mxu0 %v1675
        %2111 = vmatpush1.bf16.msra.mxu0 %v1674
        %2112 = vmatprep.subr.bf16.mxu0 %v1679
        %2113 = vmatpush1.bf16.msra.mxu0 %v1678
        %2114 = vmatprep.mubr.bf16.mxu0 %v649
        %2115 = vmatmul.mubr.bf16.gmra.mrb[0].mxu0 %v647
        %v2116 = vpop.f32.mrb[0].mxu0
        %v2117 = vadd.f32 %v2076, %v2116
        %v2118 = vpop.f32.mrb[0].mxu0
        %v2119 = vadd.f32 %v2078, %v2118
        %v2120 = vpop.f32.mrb[0].mxu0
        %v2121 = vpop.f32.mrb[0].mxu0
        %2122 = vdwg.mxu0
        %2123 = vmatprep.subr.bf16.mxu0 %v1429
        %2124 = vmatpush1.bf16.msra.mxu0 %v1428
        %2125 = vmatprep.subr.bf16.mxu0 %v1433
        %2126 = vmatpush1.bf16.msra.mxu0 %v1432
        %2127 = vmatprep.subr.bf16.mxu0 %v1437
        %2128 = vmatpush1.bf16.msra.mxu0 %v1436
        %2129 = vmatprep.subr.bf16.mxu0 %v1441
        %2130 = vmatpush1.bf16.msra.mxu0 %v1440
        %2131 = vmatprep.subr.bf16.mxu0 %v1445
        %2132 = vmatpush1.bf16.msra.mxu0 %v1444
        %2133 = vmatprep.subr.bf16.mxu0 %v1449
        %2134 = vmatpush1.bf16.msra.mxu0 %v1448
        %2135 = vmatprep.subr.bf16.mxu0 %v1453
        %2136 = vmatpush1.bf16.msra.mxu0 %v1452
        %2137 = vmatprep.subr.bf16.mxu0 %v1457
        %2138 = vmatpush1.bf16.msra.mxu0 %v1456
        %2139 = vmatprep.subr.bf16.mxu0 %v1461
        %2140 = vmatpush1.bf16.msra.mxu0 %v1460
        %2141 = vmatprep.subr.bf16.mxu0 %v1465
        %2142 = vmatpush1.bf16.msra.mxu0 %v1464
        %2143 = vmatprep.subr.bf16.mxu0 %v1469
        %2144 = vmatpush1.bf16.msra.mxu0 %v1468
        %2145 = vmatprep.subr.bf16.mxu0 %v1473
        %2146 = vmatpush1.bf16.msra.mxu0 %v1472
        %2147 = vmatprep.subr.bf16.mxu0 %v1477
        %2148 = vmatpush1.bf16.msra.mxu0 %v1476
        %2149 = vmatprep.subr.bf16.mxu0 %v1481
        %2150 = vmatpush1.bf16.msra.mxu0 %v1480
        %2151 = vmatprep.subr.bf16.mxu0 %v1485
        %2152 = vmatpush1.bf16.msra.mxu0 %v1484
        %2153 = vmatprep.subr.bf16.mxu0 %v1489
        %2154 = vmatpush1.bf16.msra.mxu0 %v1488
        %2155 = vmatprep.mubr.bf16.mxu0 %v638
        %2156 = vmatmul.mubr.bf16.gmra.mrb[0].mxu0 %v624
        %v2157 = vpop.f32.mrb[0].mxu0
        %v2158 = vadd.f32 %v1950, %v2157
        %v2159 = vpop.f32.mrb[0].mxu0
        %v2160 = vadd.f32 %v1954, %v2159
        %v2161 = vpop.f32.mrb[0].mxu0
        %v2162 = vpop.f32.mrb[0].mxu0
        %2163 = vdwg.mxu0
        %2164 = vmatprep.subr.bf16.mxu0 %v1493
        %2165 = vmatpush1.bf16.msra.mxu0 %v1492
        %2166 = vmatprep.subr.bf16.mxu0 %v1497
        %2167 = vmatpush1.bf16.msra.mxu0 %v1496
        %2168 = vmatprep.subr.bf16.mxu0 %v1501
        %2169 = vmatpush1.bf16.msra.mxu0 %v1500
        %2170 = vmatprep.subr.bf16.mxu0 %v1505
        %2171 = vmatpush1.bf16.msra.mxu0 %v1504
        %2172 = vmatprep.subr.bf16.mxu0 %v1509
        %2173 = vmatpush1.bf16.msra.mxu0 %v1508
        %2174 = vmatprep.subr.bf16.mxu0 %v1513
        %2175 = vmatpush1.bf16.msra.mxu0 %v1512
        %2176 = vmatprep.subr.bf16.mxu0 %v1517
        %2177 = vmatpush1.bf16.msra.mxu0 %v1516
        %2178 = vmatprep.subr.bf16.mxu0 %v1521
        %2179 = vmatpush1.bf16.msra.mxu0 %v1520
        %2180 = vmatprep.subr.bf16.mxu0 %v1525
        %2181 = vmatpush1.bf16.msra.mxu0 %v1524
        %2182 = vmatprep.subr.bf16.mxu0 %v1529
        %2183 = vmatpush1.bf16.msra.mxu0 %v1528
        %2184 = vmatprep.subr.bf16.mxu0 %v1533
        %2185 = vmatpush1.bf16.msra.mxu0 %v1532
        %2186 = vmatprep.subr.bf16.mxu0 %v1537
        %2187 = vmatpush1.bf16.msra.mxu0 %v1536
        %2188 = vmatprep.subr.bf16.mxu0 %v1541
        %2189 = vmatpush1.bf16.msra.mxu0 %v1540
        %2190 = vmatprep.subr.bf16.mxu0 %v1545
        %2191 = vmatpush1.bf16.msra.mxu0 %v1544
        %2192 = vmatprep.subr.bf16.mxu0 %v1549
        %2193 = vmatpush1.bf16.msra.mxu0 %v1548
        %2194 = vmatprep.subr.bf16.mxu0 %v1553
        %2195 = vmatpush1.bf16.msra.mxu0 %v1552
        %2196 = vmatprep.mubr.bf16.mxu0 %v648
        %2197 = vmatmul.mubr.bf16.gmra.mrb[0].mxu0 %v646
        %v2198 = vpop.f32.mrb[0].mxu0
        %v2199 = vadd.f32 %v2158, %v2198
        %v2200 = vpop.f32.mrb[0].mxu0
        %v2201 = vadd.f32 %v2160, %v2200
        %v2202 = vpop.f32.mrb[0].mxu0
        %v2203 = vpop.f32.mrb[0].mxu0
        %2204 = vdwg.mxu0
        %2205 = vmatprep.subr.bf16.mxu0 %v1557
        %2206 = vmatpush1.bf16.msra.mxu0 %v1556
        %2207 = vmatprep.subr.bf16.mxu0 %v1561
        %2208 = vmatpush1.bf16.msra.mxu0 %v1560
        %2209 = vmatprep.subr.bf16.mxu0 %v1565
        %2210 = vmatpush1.bf16.msra.mxu0 %v1564
        %2211 = vmatprep.subr.bf16.mxu0 %v1569
        %2212 = vmatpush1.bf16.msra.mxu0 %v1568
        %2213 = vmatprep.subr.bf16.mxu0 %v1573
        %2214 = vmatpush1.bf16.msra.mxu0 %v1572
        %2215 = vmatprep.subr.bf16.mxu0 %v1577
        %2216 = vmatpush1.bf16.msra.mxu0 %v1576
        %2217 = vmatprep.subr.bf16.mxu0 %v1581
        %2218 = vmatpush1.bf16.msra.mxu0 %v1580
        %2219 = vmatprep.subr.bf16.mxu0 %v1585
        %2220 = vmatpush1.bf16.msra.mxu0 %v1584
        %2221 = vmatprep.subr.bf16.mxu0 %v1589
        %2222 = vmatpush1.bf16.msra.mxu0 %v1588
        %2223 = vmatprep.subr.bf16.mxu0 %v1593
        %2224 = vmatpush1.bf16.msra.mxu0 %v1592
        %2225 = vmatprep.subr.bf16.mxu0 %v1597
        %2226 = vmatpush1.bf16.msra.mxu0 %v1596
        %2227 = vmatprep.subr.bf16.mxu0 %v1601
        %2228 = vmatpush1.bf16.msra.mxu0 %v1600
        %2229 = vmatprep.subr.bf16.mxu0 %v1605
        %2230 = vmatpush1.bf16.msra.mxu0 %v1604
        %2231 = vmatprep.subr.bf16.mxu0 %v1609
        %2232 = vmatpush1.bf16.msra.mxu0 %v1608
        %2233 = vmatprep.subr.bf16.mxu0 %v1613
        %2234 = vmatpush1.bf16.msra.mxu0 %v1612
        %2235 = vmatprep.subr.bf16.mxu0 %v1617
        %2236 = vmatpush1.bf16.msra.mxu0 %v1616
        %2237 = vmatprep.mubr.bf16.mxu0 %v645
        %2238 = vmatmul.mubr.bf16.gmra.mrb[0].mxu0 %v631
        %v2239 = vpop.f32.mrb[0].mxu0
        %v2240 = vadd.f32 %v2199, %v2239
        %v2241 = vpop.f32.mrb[0].mxu0
        %v2242 = vadd.f32 %v2201, %v2241
        %v2243 = vpop.f32.mrb[0].mxu0
        %v2244 = vpop.f32.mrb[0].mxu0
        %2245 = vdwg.mxu0
        %2246 = vmatprep.subr.bf16.mxu0 %v1621
        %2247 = vmatpush1.bf16.msra.mxu0 %v1620
        %2248 = vmatprep.subr.bf16.mxu0 %v1625
        %2249 = vmatpush1.bf16.msra.mxu0 %v1624
        %2250 = vmatprep.subr.bf16.mxu0 %v1629
        %2251 = vmatpush1.bf16.msra.mxu0 %v1628
        %2252 = vmatprep.subr.bf16.mxu0 %v1633
        %2253 = vmatpush1.bf16.msra.mxu0 %v1632
        %2254 = vmatprep.subr.bf16.mxu0 %v1637
        %2255 = vmatpush1.bf16.msra.mxu0 %v1636
        %2256 = vmatprep.subr.bf16.mxu0 %v1641
        %2257 = vmatpush1.bf16.msra.mxu0 %v1640
        %2258 = vmatprep.subr.bf16.mxu0 %v1645
        %2259 = vmatpush1.bf16.msra.mxu0 %v1644
        %2260 = vmatprep.subr.bf16.mxu0 %v1649
        %2261 = vmatpush1.bf16.msra.mxu0 %v1648
        %2262 = vmatprep.subr.bf16.mxu0 %v1653
        %2263 = vmatpush1.bf16.msra.mxu0 %v1652
        %2264 = vmatprep.subr.bf16.mxu0 %v1657
        %2265 = vmatpush1.bf16.msra.mxu0 %v1656
        %2266 = vmatprep.subr.bf16.mxu0 %v1661
        %2267 = vmatpush1.bf16.msra.mxu0 %v1660
        %2268 = vmatprep.subr.bf16.mxu0 %v1665
        %2269 = vmatpush1.bf16.msra.mxu0 %v1664
        %2270 = vmatprep.subr.bf16.mxu0 %v1669
        %2271 = vmatpush1.bf16.msra.mxu0 %v1668
        %2272 = vmatprep.subr.bf16.mxu0 %v1673
        %2273 = vmatpush1.bf16.msra.mxu0 %v1672
        %2274 = vmatprep.subr.bf16.mxu0 %v1677
        %2275 = vmatpush1.bf16.msra.mxu0 %v1676
        %2276 = vmatprep.subr.bf16.mxu0 %v1681
        %2277 = vmatpush1.bf16.msra.mxu0 %v1680
        %2278 = vmatprep.mubr.bf16.mxu0 %v649
        %2279 = vmatmul.mubr.bf16.gmra.mrb[0].mxu0 %v647
        %v2280 = vpop.f32.mrb[0].mxu0
        %v2281 = vadd.f32 %v2240, %v2280
        %v2282 = vpop.f32.mrb[0].mxu0
        %v2283 = vadd.f32 %v2242, %v2282
        %v2284 = vpop.f32.mrb[0].mxu0
        %v2285 = vpop.f32.mrb[0].mxu0
        %2286 = vdwg.mxu0
        %v2287 = vmax.f32 %v2117, 0.0
        %v2288 = vmax.f32 %v2119, 0.0
        %v2289 = vmax.f32 %v2281, 0.0
        %v2290 = vmax.f32 %v2283, 0.0
        %v2291 = vpack.c.bf16 %v2287, %v2287
        %v2292 = vpack.c.bf16 %v2288, %v2288
        %v2293 = vpack.c.bf16 %v2289, %v2289
        %v2294 = vpack.c.bf16 %v2290, %v2290
        %v2295 = vld [vmem:[%s3] sm:$0xff]
        %v2296 = vld [vmem:[%s3 + $0x8] sm:$0xff]
        %v2297 = vld [vmem:[%s3 + $0x10] sm:$0xff]
        %v2298 = vld [vmem:[%s3 + $0x18] sm:$0xff]
        %v2299 = vld [vmem:[%s3 + $0x20] sm:$0xff]
        %v2300 = vld [vmem:[%s3 + $0x28] sm:$0xff]
        %v2301 = vld [vmem:[%s3 + $0x30] sm:$0xff]
        %v2302 = vld [vmem:[%s3 + $0x38] sm:$0xff]
        %v2303 = vld [vmem:[%s3 + $0x40] sm:$0xff]
        %v2304 = vld [vmem:[%s3 + $0x48] sm:$0xff]
        %v2305 = vld [vmem:[%s3 + $0x50] sm:$0xff]
        %v2306 = vld [vmem:[%s3 + $0x58] sm:$0xff]
        %v2307 = vld [vmem:[%s3 + $0x60] sm:$0xff]
        %v2308 = vld [vmem:[%s3 + $0x68] sm:$0xff]
        %v2309 = vld [vmem:[%s3 + $0x70] sm:$0xff]
        %v2310 = vld [vmem:[%s3 + $0x78] sm:$0xff]
        %v2311 = vld [vmem:[%s3 + $0x80] sm:$0xff]
        %v2312 = vld [vmem:[%s3 + $0x88] sm:$0xff]
        %v2313 = vld [vmem:[%s3 + $0x90] sm:$0xff]
        %v2314 = vld [vmem:[%s3 + $0x98] sm:$0xff]
        %v2315 = vld [vmem:[%s3 + $0xa0] sm:$0xff]
        %v2316 = vld [vmem:[%s3 + $0xa8] sm:$0xff]
        %v2317 = vld [vmem:[%s3 + $0xb0] sm:$0xff]
        %v2318 = vld [vmem:[%s3 + $0xb8] sm:$0xff]
        %v2319 = vld [vmem:[%s3 + $0xc0] sm:$0xff]
        %v2320 = vld [vmem:[%s3 + $0xc8] sm:$0xff]
        %v2321 = vld [vmem:[%s3 + $0xd0] sm:$0xff]
        %v2322 = vld [vmem:[%s3 + $0xd8] sm:$0xff]
        %v2323 = vld [vmem:[%s3 + $0xe0] sm:$0xff]
        %v2324 = vld [vmem:[%s3 + $0xe8] sm:$0xff]
        %v2325 = vld [vmem:[%s3 + $0xf0] sm:$0xff]
        %v2326 = vld [vmem:[%s3 + $0xf8] sm:$0xff]
        %v2327 = vld [vmem:[%s3 + $0x100] sm:$0xff]
        %v2328 = vld [vmem:[%s3 + $0x108] sm:$0xff]
        %v2329 = vld [vmem:[%s3 + $0x110] sm:$0xff]
        %v2330 = vld [vmem:[%s3 + $0x118] sm:$0xff]
        %v2331 = vld [vmem:[%s3 + $0x120] sm:$0xff]
        %v2332 = vld [vmem:[%s3 + $0x128] sm:$0xff]
        %v2333 = vld [vmem:[%s3 + $0x130] sm:$0xff]
        %v2334 = vld [vmem:[%s3 + $0x138] sm:$0xff]
        %v2335 = vld [vmem:[%s3 + $0x140] sm:$0xff]
        %v2336 = vld [vmem:[%s3 + $0x148] sm:$0xff]
        %v2337 = vld [vmem:[%s3 + $0x150] sm:$0xff]
        %v2338 = vld [vmem:[%s3 + $0x158] sm:$0xff]
        %v2339 = vld [vmem:[%s3 + $0x160] sm:$0xff]
        %v2340 = vld [vmem:[%s3 + $0x168] sm:$0xff]
        %v2341 = vld [vmem:[%s3 + $0x170] sm:$0xff]
        %v2342 = vld [vmem:[%s3 + $0x178] sm:$0xff]
        %v2343 = vld [vmem:[%s3 + $0x180] sm:$0xff]
        %v2344 = vld [vmem:[%s3 + $0x188] sm:$0xff]
        %v2345 = vld [vmem:[%s3 + $0x190] sm:$0xff]
        %v2346 = vld [vmem:[%s3 + $0x198] sm:$0xff]
        %v2347 = vld [vmem:[%s3 + $0x1a0] sm:$0xff]
        %v2348 = vld [vmem:[%s3 + $0x1a8] sm:$0xff]
        %v2349 = vld [vmem:[%s3 + $0x1b0] sm:$0xff]
        %v2350 = vld [vmem:[%s3 + $0x1b8] sm:$0xff]
        %v2351 = vld [vmem:[%s3 + $0x1c0] sm:$0xff]
        %v2352 = vld [vmem:[%s3 + $0x1c8] sm:$0xff]
        %v2353 = vld [vmem:[%s3 + $0x1d0] sm:$0xff]
        %v2354 = vld [vmem:[%s3 + $0x1d8] sm:$0xff]
        %v2355 = vld [vmem:[%s3 + $0x1e0] sm:$0xff]
        %v2356 = vld [vmem:[%s3 + $0x1e8] sm:$0xff]
        %v2357 = vld [vmem:[%s3 + $0x1f0] sm:$0xff]
        %v2358 = vld [vmem:[%s3 + $0x1f8] sm:$0xff]
        %v2359 = vld [vmem:[%s4] sm:$0x3]
        %v2424 = vunpack.c.l.b16 %v2295
        %v2425 = vunpack.c.h.b16 %v2295
        %v2426 = vunpack.c.l.b16 %v2296
        %v2427 = vunpack.c.h.b16 %v2296
        %v2428 = vunpack.c.l.b16 %v2297
        %v2429 = vunpack.c.h.b16 %v2297
        %v2430 = vunpack.c.l.b16 %v2298
        %v2431 = vunpack.c.h.b16 %v2298
        %v2432 = vunpack.c.l.b16 %v2299
        %v2433 = vunpack.c.h.b16 %v2299
        %v2434 = vunpack.c.l.b16 %v2300
        %v2435 = vunpack.c.h.b16 %v2300
        %v2436 = vunpack.c.l.b16 %v2301
        %v2437 = vunpack.c.h.b16 %v2301
        %v2438 = vunpack.c.l.b16 %v2302
        %v2439 = vunpack.c.h.b16 %v2302
        %v2440 = vunpack.c.l.b16 %v2303
        %v2441 = vunpack.c.h.b16 %v2303
        %v2442 = vunpack.c.l.b16 %v2304
        %v2443 = vunpack.c.h.b16 %v2304
        %v2444 = vunpack.c.l.b16 %v2305
        %v2445 = vunpack.c.h.b16 %v2305
        %v2446 = vunpack.c.l.b16 %v2306
        %v2447 = vunpack.c.h.b16 %v2306
        %v2448 = vunpack.c.l.b16 %v2307
        %v2449 = vunpack.c.h.b16 %v2307
        %v2450 = vunpack.c.l.b16 %v2308
        %v2451 = vunpack.c.h.b16 %v2308
        %v2452 = vunpack.c.l.b16 %v2309
        %v2453 = vunpack.c.h.b16 %v2309
        %v2454 = vunpack.c.l.b16 %v2310
        %v2455 = vunpack.c.h.b16 %v2310
        %v2456 = vunpack.c.l.b16 %v2311
        %v2457 = vunpack.c.h.b16 %v2311
        %v2458 = vunpack.c.l.b16 %v2312
        %v2459 = vunpack.c.h.b16 %v2312
        %v2460 = vunpack.c.l.b16 %v2313
        %v2461 = vunpack.c.h.b16 %v2313
        %v2462 = vunpack.c.l.b16 %v2314
        %v2463 = vunpack.c.h.b16 %v2314
        %v2464 = vunpack.c.l.b16 %v2315
        %v2465 = vunpack.c.h.b16 %v2315
        %v2466 = vunpack.c.l.b16 %v2316
        %v2467 = vunpack.c.h.b16 %v2316
        %v2468 = vunpack.c.l.b16 %v2317
        %v2469 = vunpack.c.h.b16 %v2317
        %v2470 = vunpack.c.l.b16 %v2318
        %v2471 = vunpack.c.h.b16 %v2318
        %v2472 = vunpack.c.l.b16 %v2319
        %v2473 = vunpack.c.h.b16 %v2319
        %v2474 = vunpack.c.l.b16 %v2320
        %v2475 = vunpack.c.h.b16 %v2320
        %v2476 = vunpack.c.l.b16 %v2321
        %v2477 = vunpack.c.h.b16 %v2321
        %v2478 = vunpack.c.l.b16 %v2322
        %v2479 = vunpack.c.h.b16 %v2322
        %v2480 = vunpack.c.l.b16 %v2323
        %v2481 = vunpack.c.h.b16 %v2323
        %v2482 = vunpack.c.l.b16 %v2324
        %v2483 = vunpack.c.h.b16 %v2324
        %v2484 = vunpack.c.l.b16 %v2325
        %v2485 = vunpack.c.h.b16 %v2325
        %v2486 = vunpack.c.l.b16 %v2326
        %v2487 = vunpack.c.h.b16 %v2326
        %v2488 = vunpack.c.l.b16 %v2327
        %v2489 = vunpack.c.h.b16 %v2327
        %v2490 = vunpack.c.l.b16 %v2328
        %v2491 = vunpack.c.h.b16 %v2328
        %v2492 = vunpack.c.l.b16 %v2329
        %v2493 = vunpack.c.h.b16 %v2329
        %v2494 = vunpack.c.l.b16 %v2330
        %v2495 = vunpack.c.h.b16 %v2330
        %v2496 = vunpack.c.l.b16 %v2331
        %v2497 = vunpack.c.h.b16 %v2331
        %v2498 = vunpack.c.l.b16 %v2332
        %v2499 = vunpack.c.h.b16 %v2332
        %v2500 = vunpack.c.l.b16 %v2333
        %v2501 = vunpack.c.h.b16 %v2333
        %v2502 = vunpack.c.l.b16 %v2334
        %v2503 = vunpack.c.h.b16 %v2334
        %v2504 = vunpack.c.l.b16 %v2335
        %v2505 = vunpack.c.h.b16 %v2335
        %v2506 = vunpack.c.l.b16 %v2336
        %v2507 = vunpack.c.h.b16 %v2336
        %v2508 = vunpack.c.l.b16 %v2337
        %v2509 = vunpack.c.h.b16 %v2337
        %v2510 = vunpack.c.l.b16 %v2338
        %v2511 = vunpack.c.h.b16 %v2338
        %v2512 = vunpack.c.l.b16 %v2339
        %v2513 = vunpack.c.h.b16 %v2339
        %v2514 = vunpack.c.l.b16 %v2340
        %v2515 = vunpack.c.h.b16 %v2340
        %v2516 = vunpack.c.l.b16 %v2341
        %v2517 = vunpack.c.h.b16 %v2341
        %v2518 = vunpack.c.l.b16 %v2342
        %v2519 = vunpack.c.h.b16 %v2342
        %v2520 = vunpack.c.l.b16 %v2343
        %v2521 = vunpack.c.h.b16 %v2343
        %v2522 = vunpack.c.l.b16 %v2344
        %v2523 = vunpack.c.h.b16 %v2344
        %v2524 = vunpack.c.l.b16 %v2345
        %v2525 = vunpack.c.h.b16 %v2345
        %v2526 = vunpack.c.l.b16 %v2346
        %v2527 = vunpack.c.h.b16 %v2346
        %v2528 = vunpack.c.l.b16 %v2347
        %v2529 = vunpack.c.h.b16 %v2347
        %v2530 = vunpack.c.l.b16 %v2348
        %v2531 = vunpack.c.h.b16 %v2348
        %v2532 = vunpack.c.l.b16 %v2349
        %v2533 = vunpack.c.h.b16 %v2349
        %v2534 = vunpack.c.l.b16 %v2350
        %v2535 = vunpack.c.h.b16 %v2350
        %v2536 = vunpack.c.l.b16 %v2351
        %v2537 = vunpack.c.h.b16 %v2351
        %v2538 = vunpack.c.l.b16 %v2352
        %v2539 = vunpack.c.h.b16 %v2352
        %v2540 = vunpack.c.l.b16 %v2353
        %v2541 = vunpack.c.h.b16 %v2353
        %v2542 = vunpack.c.l.b16 %v2354
        %v2543 = vunpack.c.h.b16 %v2354
        %v2544 = vunpack.c.l.b16 %v2355
        %v2545 = vunpack.c.h.b16 %v2355
        %v2546 = vunpack.c.l.b16 %v2356
        %v2547 = vunpack.c.h.b16 %v2356
        %v2548 = vunpack.c.l.b16 %v2357
        %v2549 = vunpack.c.h.b16 %v2357
        %v2550 = vunpack.c.l.b16 %v2358
        %v2551 = vunpack.c.h.b16 %v2358
        %v2552 = vpack.c.b16 %v2426, %v2424
        %v2553 = vpack.c.b16 %v2427, %v2425
        %v2554 = vpack.c.b16 %v2430, %v2428
        %v2555 = vpack.c.b16 %v2431, %v2429
        %v2556 = vpack.c.b16 %v2434, %v2432
        %v2557 = vpack.c.b16 %v2435, %v2433
        %v2558 = vpack.c.b16 %v2438, %v2436
        %v2559 = vpack.c.b16 %v2439, %v2437
        %v2560 = vpack.c.b16 %v2442, %v2440
        %v2561 = vpack.c.b16 %v2443, %v2441
        %v2562 = vpack.c.b16 %v2446, %v2444
        %v2563 = vpack.c.b16 %v2447, %v2445
        %v2564 = vpack.c.b16 %v2450, %v2448
        %v2565 = vpack.c.b16 %v2451, %v2449
        %v2566 = vpack.c.b16 %v2454, %v2452
        %v2567 = vpack.c.b16 %v2455, %v2453
        %v2568 = vpack.c.b16 %v2458, %v2456
        %v2569 = vpack.c.b16 %v2459, %v2457
        %v2570 = vpack.c.b16 %v2462, %v2460
        %v2571 = vpack.c.b16 %v2463, %v2461
        %v2572 = vpack.c.b16 %v2466, %v2464
        %v2573 = vpack.c.b16 %v2467, %v2465
        %v2574 = vpack.c.b16 %v2470, %v2468
        %v2575 = vpack.c.b16 %v2471, %v2469
        %v2576 = vpack.c.b16 %v2474, %v2472
        %v2577 = vpack.c.b16 %v2475, %v2473
        %v2578 = vpack.c.b16 %v2478, %v2476
        %v2579 = vpack.c.b16 %v2479, %v2477
        %v2580 = vpack.c.b16 %v2482, %v2480
        %v2581 = vpack.c.b16 %v2483, %v2481
        %v2582 = vpack.c.b16 %v2486, %v2484
        %v2583 = vpack.c.b16 %v2487, %v2485
        %v2584 = vpack.c.b16 %v2490, %v2488
        %v2585 = vpack.c.b16 %v2491, %v2489
        %v2586 = vpack.c.b16 %v2494, %v2492
        %v2587 = vpack.c.b16 %v2495, %v2493
        %v2588 = vpack.c.b16 %v2498, %v2496
        %v2589 = vpack.c.b16 %v2499, %v2497
        %v2590 = vpack.c.b16 %v2502, %v2500
        %v2591 = vpack.c.b16 %v2503, %v2501
        %v2592 = vpack.c.b16 %v2506, %v2504
        %v2593 = vpack.c.b16 %v2507, %v2505
        %v2594 = vpack.c.b16 %v2510, %v2508
        %v2595 = vpack.c.b16 %v2511, %v2509
        %v2596 = vpack.c.b16 %v2514, %v2512
        %v2597 = vpack.c.b16 %v2515, %v2513
        %v2598 = vpack.c.b16 %v2518, %v2516
        %v2599 = vpack.c.b16 %v2519, %v2517
        %v2600 = vpack.c.b16 %v2522, %v2520
        %v2601 = vpack.c.b16 %v2523, %v2521
        %v2602 = vpack.c.b16 %v2526, %v2524
        %v2603 = vpack.c.b16 %v2527, %v2525
        %v2604 = vpack.c.b16 %v2530, %v2528
        %v2605 = vpack.c.b16 %v2531, %v2529
        %v2606 = vpack.c.b16 %v2534, %v2532
        %v2607 = vpack.c.b16 %v2535, %v2533
        %v2608 = vpack.c.b16 %v2538, %v2536
        %v2609 = vpack.c.b16 %v2539, %v2537
        %v2610 = vpack.c.b16 %v2542, %v2540
        %v2611 = vpack.c.b16 %v2543, %v2541
        %v2612 = vpack.c.b16 %v2546, %v2544
        %v2613 = vpack.c.b16 %v2547, %v2545
        %v2614 = vpack.c.b16 %v2550, %v2548
        %v2615 = vpack.c.b16 %v2551, %v2549
        %v2681 = vlaneseq
        %v2682 = vshrl.u32 %v2681, 7
        %v2683 = vsub.s32 0, %v2682
        %v2684 = vrot.slane %v2359, %v2683
        %v2685 = vlaneseq
        %v2686 = vshrl.u32 %v2685, 7
        %v2687 = vsub.s32 1, %v2686
        %v2688 = vrot.slane %v2359, %v2687
        %2691 = vmatprep.subr.bf16.mxu0 %v2553
        %2692 = vmatpush1.bf16.msra.mxu0 %v2552
        %2693 = vmatprep.subr.bf16.mxu0 %v2555
        %2694 = vmatpush1.bf16.msra.mxu0 %v2554
        %2695 = vmatprep.subr.bf16.mxu0 %v2557
        %2696 = vmatpush1.bf16.msra.mxu0 %v2556
        %2697 = vmatprep.subr.bf16.mxu0 %v2559
        %2698 = vmatpush1.bf16.msra.mxu0 %v2558
        %2699 = vmatprep.subr.bf16.mxu0 %v2561
        %2700 = vmatpush1.bf16.msra.mxu0 %v2560
        %2701 = vmatprep.subr.bf16.mxu0 %v2563
        %2702 = vmatpush1.bf16.msra.mxu0 %v2562
        %2703 = vmatprep.subr.bf16.mxu0 %v2565
        %2704 = vmatpush1.bf16.msra.mxu0 %v2564
        %2705 = vmatprep.subr.bf16.mxu0 %v2567
        %2706 = vmatpush1.bf16.msra.mxu0 %v2566
        %2707 = vmatprep.subr.bf16.mxu0 %v2569
        %2708 = vmatpush1.bf16.msra.mxu0 %v2568
        %2709 = vmatprep.subr.bf16.mxu0 %v2571
        %2710 = vmatpush1.bf16.msra.mxu0 %v2570
        %2711 = vmatprep.subr.bf16.mxu0 %v2573
        %2712 = vmatpush1.bf16.msra.mxu0 %v2572
        %2713 = vmatprep.subr.bf16.mxu0 %v2575
        %2714 = vmatpush1.bf16.msra.mxu0 %v2574
        %2715 = vmatprep.subr.bf16.mxu0 %v2577
        %2716 = vmatpush1.bf16.msra.mxu0 %v2576
        %2717 = vmatprep.subr.bf16.mxu0 %v2579
        %2718 = vmatpush1.bf16.msra.mxu0 %v2578
        %2719 = vmatprep.subr.bf16.mxu0 %v2581
        %2720 = vmatpush1.bf16.msra.mxu0 %v2580
        %2721 = vmatprep.subr.bf16.mxu0 %v2583
        %2722 = vmatpush1.bf16.msra.mxu0 %v2582
        %2723 = vmatprep.mubr.bf16.mxu0 %v2292
        %2724 = vmatmul.mubr.bf16.gmra.mrb[0].mxu0 %v2291
        %v2725 = vpop.f32.mrb[0].mxu0
        %v2726 = vadd.f32 %v2684, %v2725
        %v2727 = vpop.f32.mrb[0].mxu0
        %v2728 = vadd.f32 %v2688, %v2727
        %v2729 = vpop.f32.mrb[0].mxu0
        %v2730 = vpop.f32.mrb[0].mxu0
        %2731 = vdwg.mxu0
        %2732 = vmatprep.subr.bf16.mxu0 %v2585
        %2733 = vmatpush1.bf16.msra.mxu0 %v2584
        %2734 = vmatprep.subr.bf16.mxu0 %v2587
        %2735 = vmatpush1.bf16.msra.mxu0 %v2586
        %2736 = vmatprep.subr.bf16.mxu0 %v2589
        %2737 = vmatpush1.bf16.msra.mxu0 %v2588
        %2738 = vmatprep.subr.bf16.mxu0 %v2591
        %2739 = vmatpush1.bf16.msra.mxu0 %v2590
        %2740 = vmatprep.subr.bf16.mxu0 %v2593
        %2741 = vmatpush1.bf16.msra.mxu0 %v2592
        %2742 = vmatprep.subr.bf16.mxu0 %v2595
        %2743 = vmatpush1.bf16.msra.mxu0 %v2594
        %2744 = vmatprep.subr.bf16.mxu0 %v2597
        %2745 = vmatpush1.bf16.msra.mxu0 %v2596
        %2746 = vmatprep.subr.bf16.mxu0 %v2599
        %2747 = vmatpush1.bf16.msra.mxu0 %v2598
        %2748 = vmatprep.subr.bf16.mxu0 %v2601
        %2749 = vmatpush1.bf16.msra.mxu0 %v2600
        %2750 = vmatprep.subr.bf16.mxu0 %v2603
        %2751 = vmatpush1.bf16.msra.mxu0 %v2602
        %2752 = vmatprep.subr.bf16.mxu0 %v2605
        %2753 = vmatpush1.bf16.msra.mxu0 %v2604
        %2754 = vmatprep.subr.bf16.mxu0 %v2607
        %2755 = vmatpush1.bf16.msra.mxu0 %v2606
        %2756 = vmatprep.subr.bf16.mxu0 %v2609
        %2757 = vmatpush1.bf16.msra.mxu0 %v2608
        %2758 = vmatprep.subr.bf16.mxu0 %v2611
        %2759 = vmatpush1.bf16.msra.mxu0 %v2610
        %2760 = vmatprep.subr.bf16.mxu0 %v2613
        %2761 = vmatpush1.bf16.msra.mxu0 %v2612
        %2762 = vmatprep.subr.bf16.mxu0 %v2615
        %2763 = vmatpush1.bf16.msra.mxu0 %v2614
        %2764 = vmatprep.mubr.bf16.mxu0 %v2294
        %2765 = vmatmul.mubr.bf16.gmra.mrb[0].mxu0 %v2293
        %v2766 = vpop.f32.mrb[0].mxu0
        %v2767 = vadd.f32 %v2726, %v2766
        %v2768 = vpop.f32.mrb[0].mxu0
        %v2769 = vadd.f32 %v2728, %v2768
        %v2770 = vpop.f32.mrb[0].mxu0
        %v2771 = vpop.f32.mrb[0].mxu0
        %2772 = vdwg.mxu0
        %v2773 = vmax.f32 %v2767, 0.0
        %v2774 = vmax.f32 %v2769, 0.0
        %v2775 = vpack.c.bf16 %v2773, %v2773
        %v2776 = vpack.c.bf16 %v2774, %v2774
        %v2777 = vld [vmem:[%s5] sm:$0xf]
        %v2778 = vld [vmem:[%s5 + $0x4] sm:$0xf]
        %v2779 = vld [vmem:[%s5 + $0x8] sm:$0xf]
        %v2780 = vld [vmem:[%s5 + $0xc] sm:$0xf]
        %v2781 = vld [vmem:[%s5 + $0x10] sm:$0xf]
        %v2782 = vld [vmem:[%s5 + $0x14] sm:$0xf]
        %v2783 = vld [vmem:[%s5 + $0x18] sm:$0xf]
        %v2784 = vld [vmem:[%s5 + $0x1c] sm:$0xf]
        %v2785 = vld [vmem:[%s5 + $0x20] sm:$0xf]
        %v2786 = vld [vmem:[%s5 + $0x24] sm:$0xf]
        %v2787 = vld [vmem:[%s5 + $0x28] sm:$0xf]
        %v2788 = vld [vmem:[%s5 + $0x2c] sm:$0xf]
        %v2789 = vld [vmem:[%s5 + $0x30] sm:$0xf]
        %v2790 = vld [vmem:[%s5 + $0x34] sm:$0xf]
        %v2791 = vld [vmem:[%s5 + $0x38] sm:$0xf]
        %v2792 = vld [vmem:[%s5 + $0x3c] sm:$0xf]
        %v2793 = vld [vmem:[%s5 + $0x40] sm:$0xf]
        %v2794 = vld [vmem:[%s5 + $0x44] sm:$0xf]
        %v2795 = vld [vmem:[%s5 + $0x48] sm:$0xf]
        %v2796 = vld [vmem:[%s5 + $0x4c] sm:$0xf]
        %v2797 = vld [vmem:[%s5 + $0x50] sm:$0xf]
        %v2798 = vld [vmem:[%s5 + $0x54] sm:$0xf]
        %v2799 = vld [vmem:[%s5 + $0x58] sm:$0xf]
        %v2800 = vld [vmem:[%s5 + $0x5c] sm:$0xf]
        %v2801 = vld [vmem:[%s5 + $0x60] sm:$0xf]
        %v2802 = vld [vmem:[%s5 + $0x64] sm:$0xf]
        %v2803 = vld [vmem:[%s5 + $0x68] sm:$0xf]
        %v2804 = vld [vmem:[%s5 + $0x6c] sm:$0xf]
        %v2805 = vld [vmem:[%s5 + $0x70] sm:$0xf]
        %v2806 = vld [vmem:[%s5 + $0x74] sm:$0xf]
        %v2807 = vld [vmem:[%s5 + $0x78] sm:$0xf]
        %v2808 = vld [vmem:[%s5 + $0x7c] sm:$0xf]
        %v2809 = vld [vmem:[%s6] sm:$0x1]
        %v2842 = vunpack.c.l.b16 %v2777
        %v2843 = vunpack.c.l.b16 %v2778
        %v2844 = vunpack.c.l.b16 %v2779
        %v2845 = vunpack.c.l.b16 %v2780
        %v2846 = vunpack.c.l.b16 %v2781
        %v2847 = vunpack.c.l.b16 %v2782
        %v2848 = vunpack.c.l.b16 %v2783
        %v2849 = vunpack.c.l.b16 %v2784
        %v2850 = vunpack.c.l.b16 %v2785
        %v2851 = vunpack.c.l.b16 %v2786
        %v2852 = vunpack.c.l.b16 %v2787
        %v2853 = vunpack.c.l.b16 %v2788
        %v2854 = vunpack.c.l.b16 %v2789
        %v2855 = vunpack.c.l.b16 %v2790
        %v2856 = vunpack.c.l.b16 %v2791
        %v2857 = vunpack.c.l.b16 %v2792
        %v2858 = vunpack.c.l.b16 %v2793
        %v2859 = vunpack.c.l.b16 %v2794
        %v2860 = vunpack.c.l.b16 %v2795
        %v2861 = vunpack.c.l.b16 %v2796
        %v2862 = vunpack.c.l.b16 %v2797
        %v2863 = vunpack.c.l.b16 %v2798
        %v2864 = vunpack.c.l.b16 %v2799
        %v2865 = vunpack.c.l.b16 %v2800
        %v2866 = vunpack.c.l.b16 %v2801
        %v2867 = vunpack.c.l.b16 %v2802
        %v2868 = vunpack.c.l.b16 %v2803
        %v2869 = vunpack.c.l.b16 %v2804
        %v2870 = vunpack.c.l.b16 %v2805
        %v2871 = vunpack.c.l.b16 %v2806
        %v2872 = vunpack.c.l.b16 %v2807
        %v2873 = vunpack.c.l.b16 %v2808
        %v2874 = vpack.c.b16 %v2843, %v2842
        %v2875 = vpack.c.b16 %v2845, %v2844
        %v2876 = vpack.c.b16 %v2847, %v2846
        %v2877 = vpack.c.b16 %v2849, %v2848
        %v2878 = vpack.c.b16 %v2851, %v2850
        %v2879 = vpack.c.b16 %v2853, %v2852
        %v2880 = vpack.c.b16 %v2855, %v2854
        %v2881 = vpack.c.b16 %v2857, %v2856
        %v2882 = vpack.c.b16 %v2859, %v2858
        %v2883 = vpack.c.b16 %v2861, %v2860
        %v2884 = vpack.c.b16 %v2863, %v2862
        %v2885 = vpack.c.b16 %v2865, %v2864
        %v2886 = vpack.c.b16 %v2867, %v2866
        %v2887 = vpack.c.b16 %v2869, %v2868
        %v2888 = vpack.c.b16 %v2871, %v2870
        %v2889 = vpack.c.b16 %v2873, %v2872
        %2906 = vmatprep.subr.bf16.mxu0 0
        %2907 = vmatpush1.bf16.msra.mxu0 %v2874
        %2908 = vmatprep.subr.bf16.mxu0 0
        %2909 = vmatpush1.bf16.msra.mxu0 %v2875
        %2910 = vmatprep.subr.bf16.mxu0 0
        %2911 = vmatpush1.bf16.msra.mxu0 %v2876
        %2912 = vmatprep.subr.bf16.mxu0 0
        %2913 = vmatpush1.bf16.msra.mxu0 %v2877
        %2914 = vmatprep.subr.bf16.mxu0 0
        %2915 = vmatpush1.bf16.msra.mxu0 %v2878
        %2916 = vmatprep.subr.bf16.mxu0 0
        %2917 = vmatpush1.bf16.msra.mxu0 %v2879
        %2918 = vmatprep.subr.bf16.mxu0 0
        %2919 = vmatpush1.bf16.msra.mxu0 %v2880
        %2920 = vmatprep.subr.bf16.mxu0 0
        %2921 = vmatpush1.bf16.msra.mxu0 %v2881
        %2922 = vmatprep.subr.bf16.mxu0 0
        %2923 = vmatpush1.bf16.msra.mxu0 %v2882
        %2924 = vmatprep.subr.bf16.mxu0 0
        %2925 = vmatpush1.bf16.msra.mxu0 %v2883
        %2926 = vmatprep.subr.bf16.mxu0 0
        %2927 = vmatpush1.bf16.msra.mxu0 %v2884
        %2928 = vmatprep.subr.bf16.mxu0 0
        %2929 = vmatpush1.bf16.msra.mxu0 %v2885
        %2930 = vmatprep.subr.bf16.mxu0 0
        %2931 = vmatpush1.bf16.msra.mxu0 %v2886
        %2932 = vmatprep.subr.bf16.mxu0 0
        %2933 = vmatpush1.bf16.msra.mxu0 %v2887
        %2934 = vmatprep.subr.bf16.mxu0 0
        %2935 = vmatpush1.bf16.msra.mxu0 %v2888
        %2936 = vmatprep.subr.bf16.mxu0 0
        %2937 = vmatpush1.bf16.msra.mxu0 %v2889
        %2938 = vmatprep.mubr.bf16.mxu0 %v2776
        %2939 = vmatmul.mubr.bf16.gmra.mrb[0].mxu0 %v2775
        %v2940 = vpop.f32.mrb[0].mxu0
        %v2941 = vadd.f32 %v2809, %v2940
        %v2942 = vpop.f32.mrb[0].mxu0
        %v2943 = vpop.f32.mrb[0].mxu0
        %v2944 = vpop.f32.mrb[0].mxu0
        %2945 = vdwg.mxu0
        %v2946 = vmax.f32 %v2941, 0.0
        %v2947 = vpack.c.bf16 %v2946, %v2946
        %v2948 = vld [vmem:[%s7] sm:$0xf]
        %v2949 = vld [vmem:[%s7 + $0x4] sm:$0xf]
        %v2950 = vld [vmem:[%s7 + $0x8] sm:$0xf]
        %v2951 = vld [vmem:[%s7 + $0xc] sm:$0xf]
        %v2952 = vld [vmem:[%s7 + $0x10] sm:$0xf]
        %v2953 = vld [vmem:[%s7 + $0x14] sm:$0xf]
        %v2954 = vld [vmem:[%s7 + $0x18] sm:$0xf]
        %v2955 = vld [vmem:[%s7 + $0x1c] sm:$0xf]
        %v2956 = vld [vmem:[%s7 + $0x20] sm:$0xf]
        %v2957 = vld [vmem:[%s7 + $0x24] sm:$0xf]
        %v2958 = vld [vmem:[%s7 + $0x28] sm:$0xf]
        %v2959 = vld [vmem:[%s7 + $0x2c] sm:$0xf]
        %v2960 = vld [vmem:[%s7 + $0x30] sm:$0xf]
        %v2961 = vld [vmem:[%s7 + $0x34] sm:$0xf]
        %v2962 = vld [vmem:[%s7 + $0x38] sm:$0xf]
        %v2963 = vld [vmem:[%s7 + $0x3c] sm:$0xf]
        %v2964 = vld [vmem:[%s8] sm:$0x1]
        %v2981 = vunpack.c.l.b16 %v2948
        %v2982 = vunpack.c.l.b16 %v2949
        %v2983 = vunpack.c.l.b16 %v2950
        %v2984 = vunpack.c.l.b16 %v2951
        %v2985 = vunpack.c.l.b16 %v2952
        %v2986 = vunpack.c.l.b16 %v2953
        %v2987 = vunpack.c.l.b16 %v2954
        %v2988 = vunpack.c.l.b16 %v2955
        %v2989 = vunpack.c.l.b16 %v2956
        %v2990 = vunpack.c.l.b16 %v2957
        %v2991 = vunpack.c.l.b16 %v2958
        %v2992 = vunpack.c.l.b16 %v2959
        %v2993 = vunpack.c.l.b16 %v2960
        %v2994 = vunpack.c.l.b16 %v2961
        %v2995 = vunpack.c.l.b16 %v2962
        %v2996 = vunpack.c.l.b16 %v2963
        %v2997 = vpack.c.b16 %v2982, %v2981
        %v2998 = vpack.c.b16 %v2984, %v2983
        %v2999 = vpack.c.b16 %v2986, %v2985
        %v3000 = vpack.c.b16 %v2988, %v2987
        %v3001 = vpack.c.b16 %v2990, %v2989
        %v3002 = vpack.c.b16 %v2992, %v2991
        %v3003 = vpack.c.b16 %v2994, %v2993
        %v3004 = vpack.c.b16 %v2996, %v2995
        %3013 = vmatprep.subr.bf16.mxu0 0
        %3014 = vmatpush1.bf16.msra.mxu0 %v2997
        %3015 = vmatprep.subr.bf16.mxu0 0
        %3016 = vmatpush1.bf16.msra.mxu0 %v2998
        %3017 = vmatprep.subr.bf16.mxu0 0
        %3018 = vmatpush1.bf16.msra.mxu0 %v2999
        %3019 = vmatprep.subr.bf16.mxu0 0
        %3020 = vmatpush1.bf16.msra.mxu0 %v3000
        %3021 = vmatprep.subr.bf16.mxu0 0
        %3022 = vmatpush1.bf16.msra.mxu0 %v3001
        %3023 = vmatprep.subr.bf16.mxu0 0
        %3024 = vmatpush1.bf16.msra.mxu0 %v3002
        %3025 = vmatprep.subr.bf16.mxu0 0
        %3026 = vmatpush1.bf16.msra.mxu0 %v3003
        %3027 = vmatprep.subr.bf16.mxu0 0
        %3028 = vmatpush1.bf16.msra.mxu0 %v3004
        %3029 = vmatprep.subr.bf16.mxu0 0
        %3030 = vmatpush1.bf16.msra.mxu0 0
        %3031 = vmatprep.subr.bf16.mxu0 0
        %3032 = vmatpush1.bf16.msra.mxu0 0
        %3033 = vmatprep.subr.bf16.mxu0 0
        %3034 = vmatpush1.bf16.msra.mxu0 0
        %3035 = vmatprep.subr.bf16.mxu0 0
        %3036 = vmatpush1.bf16.msra.mxu0 0
        %3037 = vmatprep.subr.bf16.mxu0 0
        %3038 = vmatpush1.bf16.msra.mxu0 0
        %3039 = vmatprep.subr.bf16.mxu0 0
        %3040 = vmatpush1.bf16.msra.mxu0 0
        %3041 = vmatprep.subr.bf16.mxu0 0
        %3042 = vmatpush1.bf16.msra.mxu0 0
        %3043 = vmatprep.subr.bf16.mxu0 0
        %3044 = vmatpush1.bf16.msra.mxu0 0
        %3045 = vmatprep.mubr.bf16.mxu0 0
        %3046 = vmatmul.mubr.bf16.gmra.mrb[0].mxu0 %v2947
        %v3047 = vpop.f32.mrb[0].mxu0
        %v3048 = vadd.f32 %v2964, %v3047
        %v3049 = vpop.f32.mrb[0].mxu0
        %v3050 = vpop.f32.mrb[0].mxu0
        %v3051 = vpop.f32.mrb[0].mxu0
        %3052 = vdwg.mxu0
        %v3053 = vsub.f32 0.0, %v3048
        %v3054 = vmul.f32 %v3053, 1.442695
        %v3055 = vpow.pop %v3054
        %v3056 = vadd.f32 %v3055, 1.0
        %v3057 = vrcp.pop %v3056
        %v3058 = vmul.f32 1.0, %v3057
        %3059 = vst [vmem:[%s340] sm:$0x1] %v3058
        %p3060 = scmp.lt.s32.totalorder %s21, 1
        %s3061 = scalar_select %p3060, %s21, 1
        %s3062 = scalar_lea.vmem %s9, %s3061
        // Predicated region
        $region61: #{ba_detection_net_forward.1} parent=55 // pred_check
          %p3063 = pneg %p233
        $region62: #{ba_detection_net_forward.1} parent=55 // pred_check_branch
          %3065 = sbr.rel (%p3063) target = $region64
        $region63: #{ba_detection_net_forward.1} parent=55 // pred_region
          _
        $region64: #{ba_detection_net_forward.1} parent=55 // pred_fallthru
          _
      $region56: #{ba_detection_net_forward.1} parent=5 // pred_fallthru
        _
      %p3066 = scmp.le.s32.totalorder 2, %s16
      // Predicated region
      $region65: #{ba_detection_net_forward.1} parent=5 // pred_check
        %p3067 = pneg %p3066
      $region66: #{ba_detection_net_forward.1} parent=5 // pred_check_branch
        %3069 = sbr.rel (%p3067) target = $region68
      $region67: #{ba_detection_net_forward.1} parent=5 // pred_region
        %s3070 = ssub.s32 %s16, 2
        // Predicated region
        $region69: #{ba_detection_net_forward.1} parent=67 // pred_check
          %p3071 = pneg %p239
        $region70: #{ba_detection_net_forward.1} parent=67 // pred_check_branch
          %3073 = sbr.rel (%p3071) target = $region72
        $region71: #{ba_detection_net_forward.1} parent=67 // pred_region
          %p3074 = scmp.lt.s32.totalorder %s22, 1
          %s3075 = scalar_select %p3074, %s22, 1
          %s3076 = scalar_lea.vmem %s9, %s3075
        $region72: #{ba_detection_net_forward.1} parent=67 // pred_fallthru
          _
      $region68: #{ba_detection_net_forward.1} parent=5 // pred_fallthru
        _
    $region6: #{ba_detection_net_forward.1} parent=1 // loop_footer
      %s20 = sadd.s32 1, %s16
    $region7: #{ba_detection_net_forward.1} parent=1 // loop_footer_branch
      %15 = sbr.rel target = $region3
    $region8: #{ba_detection_net_forward.1} parent=1 // loop_exit
      _
    %3077 = vsyncpa [#allocation3], 1
    %s3078 = scalar_lea.sflag [#allocation3], 1
    %3079 = vsyncpa %s3078, 1

</llo_original>
